<compile_context>
chip_gen: v7x
topology: tpu7x:2x2x1
jax: 0.10.0
libtpu: 0.0.40
codegen_flags: <defaults>
</compile_context>

<pallas_src>
import functools

import jax
import jax.numpy as jnp
from jax.experimental import pallas as pl
from jax.experimental.pallas import tpu as pltpu


def _cdiv(a, b):
    return -(-a // b)


def _round_up(x, m):
    return _cdiv(x, m) * m


def _pad_to(a, shape):
    pads = [(0, s - d) for d, s in zip(a.shape, shape)]
    return jnp.pad(a, pads)


def _pick_vmem_limit():
    """~7/8 of per-core VMEM: ~56 MiB on v7x, ~112 MiB on v5e/v6e."""
    try:
        cap = int(pltpu.get_tpu_info().vmem_capacity_bytes)
    except Exception:
        cap = 64 * 1024 * 1024
    return max(32 * 1024 * 1024, min(cap * 7 // 8, 112 * 1024 * 1024))


def rnnmodel_kernel(x_ref, gdec_wt_ref, gdec_b_ref, w_ref, mm1_ref,
                    sbias_ref, mm2_ref, out_ref, sp_ref, *, nbasis, nsenses_p):
    """Grid: (row tiles i, vocab tiles j).  sp_ref caches sense_prob over j."""
    j = pl.program_id(1)

    @pl.when(j == 0)
    def _():
        x = x_ref[...]                                        # (tm, H) bf16

        # gate = sigmoid(gdecoder(output))                    -> (tm, M) f32
        gate = jax.nn.sigmoid(
            jnp.dot(x, gdec_wt_ref[...], preferred_element_type=jnp.float32)
            + gdec_b_ref[...])

        # Two large MXU matmuls over lane-concatenated per-basis weights:
        #   logits_all = x    @ [W_0 | ... | W_{nb-1}]        (tm, nbasis*S)
        #   coeff_all  = gate @ [M_0 | ... | M_{nb-1}]        (tm, nbasis*S)
        logits_all = jnp.dot(x, w_ref[...],
                             preferred_element_type=jnp.float32)
        coeff_all = jnp.dot(gate.astype(jnp.bfloat16), mm1_ref[...],
                            preferred_element_type=jnp.float32)

        # sum_b logits_b * coeff_b via static 128-aligned lane slices
        S = nsenses_p
        acc = logits_all[:, :S] * coeff_all[:, :S]
        for b in range(1, nbasis):
            lo = b * S
            acc = acc + logits_all[:, lo:lo + S] * coeff_all[:, lo:lo + S]

        logits = acc + sbias_ref[...]         # padded senses carry -1e30 bias

        # sense softmax in f32; EUP reciprocal for the denominator
        logits = logits - jnp.max(logits, axis=1, keepdims=True)
        p = jnp.exp(logits)
        inv = pl.reciprocal(jnp.sum(p, axis=1, keepdims=True), approx=True)
        sp_ref[...] = (p * inv).astype(sp_ref.dtype)

    # word_prob tile = sense_prob @ mm2[:, j*tn:(j+1)*tn]        -> (tm, tn)
    word_prob = jnp.dot(sp_ref[...], mm2_ref[...],
                        preferred_element_type=jnp.float32)
    out_ref[...] = jnp.log(jnp.maximum(word_prob, 1e-8)).astype(out_ref.dtype)


def rnn_model_forward(output, params, *, nbasis=3, tm=512, tn=512,
                      out_dtype=jnp.float32,
                      sense_prob_dtype=jnp.bfloat16):
    """output: (seq, batch, nhid) -> log word probs (seq*batch, ntoken)."""
    seq, bsz, nhid = output.shape
    N = seq * bsz
    x = output.reshape(N, nhid).astype(jnp.float32)

    gdec_w = params["gdec_w"]                    # (nsememes, nhid)
    gdec_b = params["gdec_b"]                    # (1, nsememes)
    mtrans = params["multi_trans"]               # (nbasis, nhid, nhid)
    mweight = params["multi_weight"].reshape(nbasis, -1)   # (nbasis, nsememes)
    mm1 = params["mm1"]                          # (nsememes, nsenses)
    mm2 = params["mm2"]                          # (nsenses, ntoken)
    sbias = params["sense_bias"]                 # (1, nsenses)

    nsememes = gdec_w.shape[0]
    nsenses = mm1.shape[1]
    ntoken = mm2.shape[1]

    # ---- grid-invariant pre-fusion (hoisted out of the kernel) --------------
    # multi_context = index_select(encoder.weight, 0, word_idx_s).t()
    mctx = params["enc_w"][params["word_idx_s"]].T           # (nhid, nsenses)
    w_fused = jnp.einsum("bdh,hs->bds", mtrans, mctx)         # (nb, nhid, nsenses)
    mw_soft = jax.nn.softmax(mweight, axis=0)                 # softmax0
    mm1_scaled = mw_soft[:, :, None] * mm1                    # (nb, nsememes, nsenses)
    gdec_wt = gdec_w.T                                        # (nhid, nsememes)

    # ---- lane padding to TPU-friendly sizes ---------------------------------
    H = _round_up(nhid, 128)
    M = _round_up(nsememes, 128)
    S = _round_up(nsenses, 128)
    BS = nbasis * S

    # ---- tile selection ------------------------------------------------------
    # tn: multiple of 128 (>=512 fills the 256-wide MXU & makes mm2 DMAs
    # HBM-efficient), capped at the padded vocab width for small shapes.
    tn = max(128, min(_round_up(tn, 128), _round_up(ntoken, 128)))
    # tm: as large as requested, but keep >= 2 row tiles so the 'parallel'
    # axis can shard across TensorCores (megacore / v7x dual-TC).
    tm = max(8, min(_round_up(tm, 8), _round_up(_cdiv(N, 2), 8)))

    gi = _cdiv(N, tm)
    gj = _cdiv(ntoken, tn)
    Np = gi * tm
    V = gj * tn

    # ---- pad + pack operands (one-time, outside the kernel) -----------------
    x_p = _pad_to(x, (Np, H)).astype(jnp.bfloat16)
    gdec_wt_p = _pad_to(gdec_wt, (H, M)).astype(jnp.bfloat16)
    gdec_b_p = _pad_to(gdec_b, (1, M)).astype(jnp.float32)
    # lane-concatenate the per-basis weights -> (H, nbasis*S), (M, nbasis*S)
    w_cat = jnp.concatenate(
        [_pad_to(w_fused[b], (H, S)) for b in range(nbasis)],
        axis=1).astype(jnp.bfloat16)
    mm1_cat = jnp.concatenate(
        [_pad_to(mm1_scaled[b], (M, S)) for b in range(nbasis)],
        axis=1).astype(jnp.bfloat16)
    mm2_p = _pad_to(mm2, (S, V)).astype(jnp.bfloat16)
    # padded senses must not participate in the sense softmax (keep f32!)
    sbias_p = jnp.full((1, S), -1e30, jnp.float32).at[:, :nsenses].set(
        sbias.astype(jnp.float32))

    kernel = functools.partial(rnnmodel_kernel, nbasis=nbasis, nsenses_p=S)
    vmem_limit = _pick_vmem_limit()

    def build_and_run(single_buffer_consts):
        def const_spec(shape):
            nd = len(shape)
            idx = lambda i, j: (0,) * nd
            if single_buffer_consts:
                # Constant block index -> fetched once; no double buffering.
                return pl.BlockSpec(shape, idx, pipeline_mode=pl.Buffered(1))
            return pl.BlockSpec(shape, idx)

        return pl.pallas_call(
            kernel,
            out_shape=jax.ShapeDtypeStruct((N, ntoken), out_dtype),
            grid_spec=pltpu.PrefetchScalarGridSpec(
                num_scalar_prefetch=0,
                grid=(gi, gj),
                in_specs=[
                    pl.BlockSpec((tm, H), lambda i, j: (i, 0)),
                    const_spec((H, M)),
                    const_spec((1, M)),
                    const_spec((H, BS)),
                    const_spec((M, BS)),
                    const_spec((1, S)),
                    pl.BlockSpec((S, tn), lambda i, j: (0, j)),
                ],
                out_specs=pl.BlockSpec((tm, tn), lambda i, j: (i, j)),
                scratch_shapes=[pltpu.VMEM((tm, S), sense_prob_dtype)],
            ),
            compiler_params=pltpu.CompilerParams(
                dimension_semantics=("parallel", "arbitrary"),
                vmem_limit_bytes=vmem_limit),
        )(x_p, gdec_wt_p, gdec_b_p, w_cat, mm1_cat, sbias_p, mm2_p)

    try:
        return build_and_run(True)
    except Exception:
        # This JAX build rejects pipeline_mode on top-level BlockSpecs;
        # fall back to default (double) buffering of the constant blocks.
        return build_and_run(False)


def reference_forward(output, params, *, nbasis=3):
    """Plain-JAX (f32) reproduction of RNNModel.forward for verification."""
    seq, bsz, nhid = output.shape
    x = output.reshape(seq * bsz, nhid).astype(jnp.float32)
    gate = jax.nn.sigmoid(x @ params["gdec_w"].T + params["gdec_b"])
    mw = params["multi_weight"]                               # (nbasis,1,nsememes)
    mw_soft = jax.nn.softmax(mw, axis=0)
    mctx = params["enc_w"][params["word_idx_s"]].T
    multi_transed = jnp.einsum("nd,bdh->bnh", x, params["multi_trans"])
    multi_logits = jnp.einsum("bnh,hs->bns", multi_transed, mctx)
    multi_coeff = gate[None] * mw_soft                        # (nbasis,N,nsememes)
    multi_coeff = jnp.einsum("bnm,ms->bns", multi_coeff, params["mm1"])
    logits = jnp.sum(multi_logits * multi_coeff, axis=0) + params["sense_bias"]
    sense_prob = jax.nn.softmax(logits, axis=1)
    word_prob = sense_prob @ params["mm2"]
    return jnp.log(jnp.maximum(word_prob, 1e-8))


def make_params(key, *, ntoken, nhid, nsememes, nsenses, nbasis):
    ks = jax.random.split(key, 6)
    initrange = 0.1
    enc_w = jax.random.uniform(ks[0], (ntoken, nhid), jnp.float32,
                               -initrange, initrange)
    gdec_w = jax.random.uniform(ks[1], (nsememes, nhid), jnp.float32,
                                -initrange, initrange)
    gdec_b = jnp.zeros((1, nsememes), jnp.float32)
    multi_trans = jax.random.uniform(ks[2], (nbasis, nhid, nhid), jnp.float32,
                                     -initrange, initrange)
    multi_weight = jax.random.uniform(ks[3], (nbasis, 1, nsememes), jnp.float32,
                                      -initrange, initrange)
    sense_bias = jnp.zeros((1, nsenses), jnp.float32)
    # sense -> owning word (deterministic); mymm2 materialised as a 0/1 matrix
    word_idx_s = (jnp.arange(nsenses) * 7) % ntoken
    mm2 = jax.nn.one_hot(word_idx_s, ntoken, dtype=jnp.float32)  # (nsenses, ntoken)
    # mymm1: sememe -> sense binary incidence matrix
    mm1 = jax.random.bernoulli(ks[4], 0.3, (nsememes, nsenses)).astype(jnp.float32)
    return dict(enc_w=enc_w, gdec_w=gdec_w, gdec_b=gdec_b,
                multi_trans=multi_trans, multi_weight=multi_weight,
                sense_bias=sense_bias, word_idx_s=word_idx_s,
                mm1=mm1, mm2=mm2)


if __name__ == "__main__":
    ntoken, nhid, nsememes, nsenses, nbasis = 48, 32, 16, 24, 3
    seq, batch = 8, 2

    key = jax.random.PRNGKey(0)
    pkey, xkey = jax.random.split(key)
    params = make_params(pkey, ntoken=ntoken, nhid=nhid, nsememes=nsememes,
                         nsenses=nsenses, nbasis=nbasis)
    output = jax.random.normal(xkey, (seq, batch, nhid), jnp.float32)

    out = rnn_model_forward(output, params, nbasis=nbasis)
    out = jax.block_until_ready(out)

    ref = jax.block_until_ready(reference_forward(output, params, nbasis=nbasis))
    assert out.shape == (seq * batch, ntoken)
    # bf16 MXU operands (f32 accumulation) + approx EUP reciprocal -> 2e-2 tol.
    assert jnp.allclose(out, ref, rtol=2e-2, atol=2e-2), (
        float(jnp.max(jnp.abs(out - ref))))

    print("KERNEL_OK")
</pallas_src>

<mosaic_0001>
module attributes {stable_mosaic.version = 11 : i64} {
  func.func @rnnmodel_kernel(%arg0: i32, %arg1: i32, %arg2: memref<8x128xbf16, #tpu.memory_space<vmem>>, %arg3: memref<128x128xbf16, #tpu.memory_space<vmem>>, %arg4: memref<1x128xf32, #tpu.memory_space<vmem>>, %arg5: memref<128x384xbf16, #tpu.memory_space<vmem>>, %arg6: memref<128x384xbf16, #tpu.memory_space<vmem>>, %arg7: memref<1x128xf32, #tpu.memory_space<vmem>>, %arg8: memref<128x128xbf16, #tpu.memory_space<vmem>>, %arg9: memref<8x128xf32, #tpu.memory_space<vmem>>, %arg10: memref<8x128xbf16, #tpu.memory_space<vmem>>) attributes {dimension_semantics = [#tpu.dimension_semantics<parallel>, #tpu.dimension_semantics<arbitrary>], iteration_bounds = array<i64: 2, 1>, scalar_prefetch = 0 : i64, scratch_operands = 1 : i64, tpu.core_type = #tpu.core_type<tc>, window_params = [{transform_indices = @transform_0, window_bounds = array<i64: 8, 128>}, {pipeline_mode = #tpu.pipeline_mode<synchronous>, transform_indices = @transform_1, window_bounds = array<i64: 128, 128>}, {pipeline_mode = #tpu.pipeline_mode<synchronous>, transform_indices = @transform_2, window_bounds = array<i64: 1, 128>}, {pipeline_mode = #tpu.pipeline_mode<synchronous>, transform_indices = @transform_3, window_bounds = array<i64: 128, 384>}, {pipeline_mode = #tpu.pipeline_mode<synchronous>, transform_indices = @transform_4, window_bounds = array<i64: 128, 384>}, {pipeline_mode = #tpu.pipeline_mode<synchronous>, transform_indices = @transform_5, window_bounds = array<i64: 1, 128>}, {transform_indices = @transform_6, window_bounds = array<i64: 128, 128>}, {transform_indices = @transform_7, window_bounds = array<i64: 8, 128>}]} {
    %c0_i32 = arith.constant 0 : i32
    %0 = arith.cmpi eq, %arg1, %c0_i32 : i32
    %1 = arith.extui %0 : i1 to i32
    %c0_i32_0 = arith.constant 0 : i32
    %2 = arith.cmpi ne, %1, %c0_i32_0 : i32
    scf.if %2 {
      %c0_7 = arith.constant 0 : index
      %c0_8 = arith.constant 0 : index
      %10 = vector.load %arg2[%c0_7, %c0_8] : memref<8x128xbf16, #tpu.memory_space<vmem>>, vector<8x128xbf16>
      %c0_9 = arith.constant 0 : index
      %c0_10 = arith.constant 0 : index
      %11 = vector.load %arg3[%c0_9, %c0_10] : memref<128x128xbf16, #tpu.memory_space<vmem>>, vector<128x128xbf16>
      %cst_11 = arith.constant dense<0.000000e+00> : vector<8x128xf32>
      %12 = tpu.matmul %10, %11, %cst_11 {dimension_numbers = #tpu.dot_dimension_numbers<[1], [0], [0], [1], [0, 0, 1, 1], [], []>} : vector<8x128xbf16>, vector<128x128xbf16>, vector<8x128xf32> -> vector<8x128xf32>
      %c0_12 = arith.constant 0 : index
      %c0_13 = arith.constant 0 : index
      %13 = vector.load %arg4[%c0_12, %c0_13] : memref<1x128xf32, #tpu.memory_space<vmem>>, vector<1x128xf32>
      %14 = vector.broadcast %13 : vector<1x128xf32> to vector<8x128xf32>
      %15 = arith.addf %12, %14 : vector<8x128xf32>
      %16 = arith.negf %15 : vector<8x128xf32>
      %17 = math.exp %16 : vector<8x128xf32>
      %cst_14 = arith.constant 1.000000e+00 : f32
      %18 = vector.broadcast %cst_14 : f32 to vector<8x128xf32>
      %19 = arith.addf %18, %17 : vector<8x128xf32>
      %20 = arith.divf %18, %19 : vector<8x128xf32>
      %c0_15 = arith.constant 0 : index
      %c0_16 = arith.constant 0 : index
      %21 = vector.load %arg5[%c0_15, %c0_16] : memref<128x384xbf16, #tpu.memory_space<vmem>>, vector<128x384xbf16>
      %cst_17 = arith.constant dense<0.000000e+00> : vector<8x384xf32>
      %22 = tpu.matmul %10, %21, %cst_17 {dimension_numbers = #tpu.dot_dimension_numbers<[1], [0], [0], [1], [0, 0, 1, 1], [], []>} : vector<8x128xbf16>, vector<128x384xbf16>, vector<8x384xf32> -> vector<8x384xf32>
      %23 = arith.truncf %20 : vector<8x128xf32> to vector<8x128xbf16>
      %c0_18 = arith.constant 0 : index
      %c0_19 = arith.constant 0 : index
      %24 = vector.load %arg6[%c0_18, %c0_19] : memref<128x384xbf16, #tpu.memory_space<vmem>>, vector<128x384xbf16>
      %cst_20 = arith.constant dense<0.000000e+00> : vector<8x384xf32>
      %25 = tpu.matmul %23, %24, %cst_20 {dimension_numbers = #tpu.dot_dimension_numbers<[1], [0], [0], [1], [0, 0, 1, 1], [], []>} : vector<8x128xbf16>, vector<128x384xbf16>, vector<8x384xf32> -> vector<8x384xf32>
      %26 = vector.extract_strided_slice %22 {offsets = [0, 0], sizes = [8, 128], strides = [1, 1]} : vector<8x384xf32> to vector<8x128xf32>
      %27 = vector.extract_strided_slice %25 {offsets = [0, 0], sizes = [8, 128], strides = [1, 1]} : vector<8x384xf32> to vector<8x128xf32>
      %28 = arith.mulf %26, %27 : vector<8x128xf32>
      %29 = vector.extract_strided_slice %22 {offsets = [0, 128], sizes = [8, 128], strides = [1, 1]} : vector<8x384xf32> to vector<8x128xf32>
      %30 = vector.extract_strided_slice %25 {offsets = [0, 128], sizes = [8, 128], strides = [1, 1]} : vector<8x384xf32> to vector<8x128xf32>
      %31 = arith.mulf %29, %30 : vector<8x128xf32>
      %32 = arith.addf %28, %31 : vector<8x128xf32>
      %33 = vector.extract_strided_slice %22 {offsets = [0, 256], sizes = [8, 128], strides = [1, 1]} : vector<8x384xf32> to vector<8x128xf32>
      %34 = vector.extract_strided_slice %25 {offsets = [0, 256], sizes = [8, 128], strides = [1, 1]} : vector<8x384xf32> to vector<8x128xf32>
      %35 = arith.mulf %33, %34 : vector<8x128xf32>
      %36 = arith.addf %32, %35 : vector<8x128xf32>
      %c0_21 = arith.constant 0 : index
      %c0_22 = arith.constant 0 : index
      %37 = vector.load %arg7[%c0_21, %c0_22] : memref<1x128xf32, #tpu.memory_space<vmem>>, vector<1x128xf32>
      %38 = vector.broadcast %37 : vector<1x128xf32> to vector<8x128xf32>
      %39 = arith.addf %36, %38 : vector<8x128xf32>
      %cst_23 = arith.constant dense<0xFF800000> : vector<8xf32>
      %40 = vector.multi_reduction <maximumf>, %39, %cst_23 [1] : vector<8x128xf32> to vector<8xf32>
      %41 = vector.shape_cast %40 : vector<8xf32> to vector<8x1xf32>
      %42 = vector.broadcast %41 : vector<8x1xf32> to vector<8x128xf32>
      %43 = arith.subf %39, %42 : vector<8x128xf32>
      %44 = math.exp %43 : vector<8x128xf32>
      %cst_24 = arith.constant dense<0.000000e+00> : vector<8xf32>
      %45 = vector.multi_reduction <add>, %44, %cst_24 [1] : vector<8x128xf32> to vector<8xf32>
      %46 = vector.shape_cast %45 : vector<8xf32> to vector<8x1xf32>
      %47 = tpu.reciprocal %46 {approx = true} : vector<8x1xf32> -> vector<8x1xf32>
      %48 = vector.broadcast %47 : vector<8x1xf32> to vector<8x128xf32>
      %49 = arith.mulf %44, %48 : vector<8x128xf32>
      %50 = arith.truncf %49 : vector<8x128xf32> to vector<8x128xbf16>
      %c0_25 = arith.constant 0 : index
      %c0_26 = arith.constant 0 : index
      %51 = vector.load %arg10[%c0_25, %c0_26] : memref<8x128xbf16, #tpu.memory_space<vmem>>, vector<8x128xbf16>
      tpu.vector_store %arg10[%c0_25, %c0_26], %50 {strides = array<i32>} : memref<8x128xbf16, #tpu.memory_space<vmem>>, vector<8x128xbf16>,
    } else {
    }
    %c0 = arith.constant 0 : index
    %c0_1 = arith.constant 0 : index
    %3 = vector.load %arg10[%c0, %c0_1] : memref<8x128xbf16, #tpu.memory_space<vmem>>, vector<8x128xbf16>
    %c0_2 = arith.constant 0 : index
    %c0_3 = arith.constant 0 : index
    %4 = vector.load %arg8[%c0_2, %c0_3] : memref<128x128xbf16, #tpu.memory_space<vmem>>, vector<128x128xbf16>
    %cst = arith.constant dense<0.000000e+00> : vector<8x128xf32>
    %5 = tpu.matmul %3, %4, %cst {dimension_numbers = #tpu.dot_dimension_numbers<[1], [0], [0], [1], [0, 0, 1, 1], [], []>} : vector<8x128xbf16>, vector<128x128xbf16>, vector<8x128xf32> -> vector<8x128xf32>
    %cst_4 = arith.constant 9.99999993E-9 : f32
    %6 = vector.broadcast %cst_4 : f32 to vector<8x128xf32>
    %7 = arith.maximumf %5, %6 : vector<8x128xf32>
    %8 = math.log %7 : vector<8x128xf32>
    %c0_5 = arith.constant 0 : index
    %c0_6 = arith.constant 0 : index
    %9 = vector.load %arg9[%c0_5, %c0_6] : memref<8x128xf32, #tpu.memory_space<vmem>>, vector<8x128xf32>
    tpu.vector_store %arg9[%c0_5, %c0_6], %8 {strides = array<i32>} : memref<8x128xf32, #tpu.memory_space<vmem>>, vector<8x128xf32>,
    return
  }
  func.func @transform_0(%arg0: i32, %arg1: i32) -> (i32, i32) {
    %c0_i32 = arith.constant 0 : i32
    %c0_i32_0 = arith.constant 0 : i32
    return %arg0, %c0_i32 : i32, i32
  }
  func.func @transform_1(%arg0: i32, %arg1: i32) -> (i32, i32) {
    %c0_i32 = arith.constant 0 : i32
    %c0_i32_0 = arith.constant 0 : i32
    %c0_i32_1 = arith.constant 0 : i32
    return %c0_i32, %c0_i32_0 : i32, i32
  }
  func.func @transform_2(%arg0: i32, %arg1: i32) -> (i32, i32) {
    %c0_i32 = arith.constant 0 : i32
    %c0_i32_0 = arith.constant 0 : i32
    %c0_i32_1 = arith.constant 0 : i32
    return %c0_i32, %c0_i32_0 : i32, i32
  }
  func.func @transform_3(%arg0: i32, %arg1: i32) -> (i32, i32) {
    %c0_i32 = arith.constant 0 : i32
    %c0_i32_0 = arith.constant 0 : i32
    %c0_i32_1 = arith.constant 0 : i32
    return %c0_i32, %c0_i32_0 : i32, i32
  }
  func.func @transform_4(%arg0: i32, %arg1: i32) -> (i32, i32) {
    %c0_i32 = arith.constant 0 : i32
    %c0_i32_0 = arith.constant 0 : i32
    %c0_i32_1 = arith.constant 0 : i32
    return %c0_i32, %c0_i32_0 : i32, i32
  }
  func.func @transform_5(%arg0: i32, %arg1: i32) -> (i32, i32) {
    %c0_i32 = arith.constant 0 : i32
    %c0_i32_0 = arith.constant 0 : i32
    %c0_i32_1 = arith.constant 0 : i32
    return %c0_i32, %c0_i32_0 : i32, i32
  }
  func.func @transform_6(%arg0: i32, %arg1: i32) -> (i32, i32) {
    %c0_i32 = arith.constant 0 : i32
    %c0_i32_0 = arith.constant 0 : i32
    return %c0_i32, %arg1 : i32, i32
  }
  func.func @transform_7(%arg0: i32, %arg1: i32) -> (i32, i32) {
    %c0_i32 = arith.constant 0 : i32
    return %arg0, %arg1 : i32, i32
  }
}

module attributes {stable_mosaic.version = 11 : i64} {
  func.func @rnnmodel_kernel(%arg0: i32, %arg1: i32, %arg2: memref<8x128xbf16, #tpu.memory_space<vmem>>, %arg3: memref<128x128xbf16, #tpu.memory_space<vmem>>, %arg4: memref<1x128xf32, #tpu.memory_space<vmem>>, %arg5: memref<128x384xbf16, #tpu.memory_space<vmem>>, %arg6: memref<128x384xbf16, #tpu.memory_space<vmem>>, %arg7: memref<1x128xf32, #tpu.memory_space<vmem>>, %arg8: memref<128x128xbf16, #tpu.memory_space<vmem>>, %arg9: memref<8x128xf32, #tpu.memory_space<vmem>>, %arg10: memref<8x128xbf16, #tpu.memory_space<vmem>>) attributes {dimension_semantics = [#tpu.dimension_semantics<parallel>, #tpu.dimension_semantics<arbitrary>], iteration_bounds = array<i64: 2, 1>, scalar_prefetch = 0 : i64, scratch_operands = 1 : i64, tpu.core_type = #tpu.core_type<tc>, window_params = [{transform_indices = @transform_0, window_bounds = array<i64: 8, 128>}, {pipeline_mode = #tpu.pipeline_mode<synchronous>, transform_indices = @transform_1, window_bounds = array<i64: 128, 128>}, {pipeline_mode = #tpu.pipeline_mode<synchronous>, transform_indices = @transform_2, window_bounds = array<i64: 1, 128>}, {pipeline_mode = #tpu.pipeline_mode<synchronous>, transform_indices = @transform_3, window_bounds = array<i64: 128, 384>}, {pipeline_mode = #tpu.pipeline_mode<synchronous>, transform_indices = @transform_4, window_bounds = array<i64: 128, 384>}, {pipeline_mode = #tpu.pipeline_mode<synchronous>, transform_indices = @transform_5, window_bounds = array<i64: 1, 128>}, {transform_indices = @transform_6, window_bounds = array<i64: 128, 128>}, {transform_indices = @transform_7, window_bounds = array<i64: 8, 128>}]} {
    %c0_i32 = arith.constant 0 : i32
    %0 = arith.cmpi eq, %arg1, %c0_i32 : i32
    %1 = arith.extui %0 : i1 to i32
    %c0_i32_0 = arith.constant 0 : i32
    %2 = arith.cmpi ne, %1, %c0_i32_0 : i32
    scf.if %2 {
      %c0_7 = arith.constant 0 : index
      %c0_8 = arith.constant 0 : index
      %10 = vector.load %arg2[%c0_7, %c0_8] : memref<8x128xbf16, #tpu.memory_space<vmem>>, vector<8x128xbf16>
      %c0_9 = arith.constant 0 : index
      %c0_10 = arith.constant 0 : index
      %11 = vector.load %arg3[%c0_9, %c0_10] : memref<128x128xbf16, #tpu.memory_space<vmem>>, vector<128x128xbf16>
      %cst_11 = arith.constant dense<0.000000e+00> : vector<8x128xf32>
      %12 = tpu.matmul %10, %11, %cst_11 {dimension_numbers = #tpu.dot_dimension_numbers<[1], [0], [0], [1], [0, 0, 1, 1], [], []>} : vector<8x128xbf16>, vector<128x128xbf16>, vector<8x128xf32> -> vector<8x128xf32>
      %c0_12 = arith.constant 0 : index
      %c0_13 = arith.constant 0 : index
      %13 = vector.load %arg4[%c0_12, %c0_13] : memref<1x128xf32, #tpu.memory_space<vmem>>, vector<1x128xf32>
      %14 = vector.broadcast %13 : vector<1x128xf32> to vector<8x128xf32>
      %15 = arith.addf %12, %14 : vector<8x128xf32>
      %16 = arith.negf %15 : vector<8x128xf32>
      %17 = math.exp %16 : vector<8x128xf32>
      %cst_14 = arith.constant 1.000000e+00 : f32
      %18 = vector.broadcast %cst_14 : f32 to vector<8x128xf32>
      %19 = arith.addf %18, %17 : vector<8x128xf32>
      %20 = arith.divf %18, %19 : vector<8x128xf32>
      %c0_15 = arith.constant 0 : index
      %c0_16 = arith.constant 0 : index
      %21 = vector.load %arg5[%c0_15, %c0_16] : memref<128x384xbf16, #tpu.memory_space<vmem>>, vector<128x384xbf16>
      %cst_17 = arith.constant dense<0.000000e+00> : vector<8x384xf32>
      %22 = tpu.matmul %10, %21, %cst_17 {dimension_numbers = #tpu.dot_dimension_numbers<[1], [0], [0], [1], [0, 0, 1, 1], [], []>} : vector<8x128xbf16>, vector<128x384xbf16>, vector<8x384xf32> -> vector<8x384xf32>
      %23 = arith.truncf %20 : vector<8x128xf32> to vector<8x128xbf16>
      %c0_18 = arith.constant 0 : index
      %c0_19 = arith.constant 0 : index
      %24 = vector.load %arg6[%c0_18, %c0_19] : memref<128x384xbf16, #tpu.memory_space<vmem>>, vector<128x384xbf16>
      %cst_20 = arith.constant dense<0.000000e+00> : vector<8x384xf32>
      %25 = tpu.matmul %23, %24, %cst_20 {dimension_numbers = #tpu.dot_dimension_numbers<[1], [0], [0], [1], [0, 0, 1, 1], [], []>} : vector<8x128xbf16>, vector<128x384xbf16>, vector<8x384xf32> -> vector<8x384xf32>
      %26 = vector.extract_strided_slice %22 {offsets = [0, 0], sizes = [8, 128], strides = [1, 1]} : vector<8x384xf32> to vector<8x128xf32>
      %27 = vector.extract_strided_slice %25 {offsets = [0, 0], sizes = [8, 128], strides = [1, 1]} : vector<8x384xf32> to vector<8x128xf32>
      %28 = arith.mulf %26, %27 : vector<8x128xf32>
      %29 = vector.extract_strided_slice %22 {offsets = [0, 128], sizes = [8, 128], strides = [1, 1]} : vector<8x384xf32> to vector<8x128xf32>
      %30 = vector.extract_strided_slice %25 {offsets = [0, 128], sizes = [8, 128], strides = [1, 1]} : vector<8x384xf32> to vector<8x128xf32>
      %31 = arith.mulf %29, %30 : vector<8x128xf32>
      %32 = arith.addf %28, %31 : vector<8x128xf32>
      %33 = vector.extract_strided_slice %22 {offsets = [0, 256], sizes = [8, 128], strides = [1, 1]} : vector<8x384xf32> to vector<8x128xf32>
      %34 = vector.extract_strided_slice %25 {offsets = [0, 256], sizes = [8, 128], strides = [1, 1]} : vector<8x384xf32> to vector<8x128xf32>
      %35 = arith.mulf %33, %34 : vector<8x128xf32>
      %36 = arith.addf %32, %35 : vector<8x128xf32>
      %c0_21 = arith.constant 0 : index
      %c0_22 = arith.constant 0 : index
      %37 = vector.load %arg7[%c0_21, %c0_22] : memref<1x128xf32, #tpu.memory_space<vmem>>, vector<1x128xf32>
      %38 = vector.broadcast %37 : vector<1x128xf32> to vector<8x128xf32>
      %39 = arith.addf %36, %38 : vector<8x128xf32>
      %cst_23 = arith.constant dense<0xFF800000> : vector<8xf32>
      %40 = vector.multi_reduction <maximumf>, %39, %cst_23 [1] : vector<8x128xf32> to vector<8xf32>
      %41 = vector.shape_cast %40 : vector<8xf32> to vector<8x1xf32>
      %42 = vector.broadcast %41 : vector<8x1xf32> to vector<8x128xf32>
      %43 = arith.subf %39, %42 : vector<8x128xf32>
      %44 = math.exp %43 : vector<8x128xf32>
      %cst_24 = arith.constant dense<0.000000e+00> : vector<8xf32>
      %45 = vector.multi_reduction <add>, %44, %cst_24 [1] : vector<8x128xf32> to vector<8xf32>
      %46 = vector.shape_cast %45 : vector<8xf32> to vector<8x1xf32>
      %47 = tpu.reciprocal %46 {approx = true} : vector<8x1xf32> -> vector<8x1xf32>
      %48 = vector.broadcast %47 : vector<8x1xf32> to vector<8x128xf32>
      %49 = arith.mulf %44, %48 : vector<8x128xf32>
      %50 = arith.truncf %49 : vector<8x128xf32> to vector<8x128xbf16>
      %c0_25 = arith.constant 0 : index
      %c0_26 = arith.constant 0 : index
      %51 = vector.load %arg10[%c0_25, %c0_26] : memref<8x128xbf16, #tpu.memory_space<vmem>>, vector<8x128xbf16>
      tpu.vector_store %arg10[%c0_25, %c0_26], %50 {strides = array<i32>} : memref<8x128xbf16, #tpu.memory_space<vmem>>, vector<8x128xbf16>,
    } else {
    }
    %c0 = arith.constant 0 : index
    %c0_1 = arith.constant 0 : index
    %3 = vector.load %arg10[%c0, %c0_1] : memref<8x128xbf16, #tpu.memory_space<vmem>>, vector<8x128xbf16>
    %c0_2 = arith.constant 0 : index
    %c0_3 = arith.constant 0 : index
    %4 = vector.load %arg8[%c0_2, %c0_3] : memref<128x128xbf16, #tpu.memory_space<vmem>>, vector<128x128xbf16>
    %cst = arith.constant dense<0.000000e+00> : vector<8x128xf32>
    %5 = tpu.matmul %3, %4, %cst {dimension_numbers = #tpu.dot_dimension_numbers<[1], [0], [0], [1], [0, 0, 1, 1], [], []>} : vector<8x128xbf16>, vector<128x128xbf16>, vector<8x128xf32> -> vector<8x128xf32>
    %cst_4 = arith.constant 9.99999993E-9 : f32
    %6 = vector.broadcast %cst_4 : f32 to vector<8x128xf32>
    %7 = arith.maximumf %5, %6 : vector<8x128xf32>
    %8 = math.log %7 : vector<8x128xf32>
    %c0_5 = arith.constant 0 : index
    %c0_6 = arith.constant 0 : index
    %9 = vector.load %arg9[%c0_5, %c0_6] : memref<8x128xf32, #tpu.memory_space<vmem>>, vector<8x128xf32>
    tpu.vector_store %arg9[%c0_5, %c0_6], %8 {strides = array<i32>} : memref<8x128xf32, #tpu.memory_space<vmem>>, vector<8x128xf32>,
    return
  }
  func.func @transform_0(%arg0: i32, %arg1: i32) -> (i32, i32) {
    %c0_i32 = arith.constant 0 : i32
    %c0_i32_0 = arith.constant 0 : i32
    return %arg0, %c0_i32 : i32, i32
  }
  func.func @transform_1(%arg0: i32, %arg1: i32) -> (i32, i32) {
    %c0_i32 = arith.constant 0 : i32
    %c0_i32_0 = arith.constant 0 : i32
    %c0_i32_1 = arith.constant 0 : i32
    return %c0_i32, %c0_i32_0 : i32, i32
  }
  func.func @transform_2(%arg0: i32, %arg1: i32) -> (i32, i32) {
    %c0_i32 = arith.constant 0 : i32
    %c0_i32_0 = arith.constant 0 : i32
    %c0_i32_1 = arith.constant 0 : i32
    return %c0_i32, %c0_i32_0 : i32, i32
  }
  func.func @transform_3(%arg0: i32, %arg1: i32) -> (i32, i32) {
    %c0_i32 = arith.constant 0 : i32
    %c0_i32_0 = arith.constant 0 : i32
    %c0_i32_1 = arith.constant 0 : i32
    return %c0_i32, %c0_i32_0 : i32, i32
  }
  func.func @transform_4(%arg0: i32, %arg1: i32) -> (i32, i32) {
    %c0_i32 = arith.constant 0 : i32
    %c0_i32_0 = arith.constant 0 : i32
    %c0_i32_1 = arith.constant 0 : i32
    return %c0_i32, %c0_i32_0 : i32, i32
  }
  func.func @transform_5(%arg0: i32, %arg1: i32) -> (i32, i32) {
    %c0_i32 = arith.constant 0 : i32
    %c0_i32_0 = arith.constant 0 : i32
    %c0_i32_1 = arith.constant 0 : i32
    return %c0_i32, %c0_i32_0 : i32, i32
  }
  func.func @transform_6(%arg0: i32, %arg1: i32) -> (i32, i32) {
    %c0_i32 = arith.constant 0 : i32
    %c0_i32_0 = arith.constant 0 : i32
    return %c0_i32, %arg1 : i32, i32
  }
  func.func @transform_7(%arg0: i32, %arg1: i32) -> (i32, i32) {
    %c0_i32 = arith.constant 0 : i32
    return %arg0, %arg1 : i32, i32
  }
}

</mosaic_0001>

<llo_original>
// kernel: tpu_custom_call.1
$region0: #{tpu_custom_call.1}
  #allocation0 [shape = 'u32[]', space=smem, size = 0x4, offset = 0x4, fixed_abs, tag = 'smem constant byte address 0x4 - core index']
  #allocation1 [shape = 'u32[144,128]{1,0:T(1,128)}', space=vmem, size = 0x12000, scoped, tag = 'internal scratch']
  #allocation2 [shape = 'bf16[8,128]{1,0:T(8,128)(2,1)}', space=vmem, size = 0x800, scoped, tag = 'scratch operand']
  %s0 = inlined_call_operand.hbm [shape: bf16[16,128], index: 0, kind: input, shape index: {}]
  %s1 = inlined_call_operand.hbm [shape: bf16[128,128], index: 1, kind: input, shape index: {}]
  %s2 = inlined_call_operand.vmem [shape: f32[1,128], index: 2, kind: input, shape index: {}]
  %s3 = inlined_call_operand.hbm [shape: bf16[128,384], index: 3, kind: input, shape index: {}]
  %s4 = inlined_call_operand.hbm [shape: bf16[128,384], index: 4, kind: input, shape index: {}]
  %s5 = inlined_call_operand.vmem [shape: f32[1,128], index: 5, kind: input, shape index: {}]
  %s6 = inlined_call_operand.hbm [shape: bf16[128,128], index: 6, kind: input, shape index: {}]
  %s7 = inlined_call_operand.hbm [shape: f32[16,48], index: 7, kind: output, shape index: {}]
  %s8 = sld [smem:[#allocation0]]
  $region85: #{tpu_custom_call.1} parent=0
    _
  %s10 = ssub.s32 1, %s8
  %s11 = scalar_select 0, %s10, %s8
  $region1: #{tpu_custom_call.1} parent=0
    #allocation3 [shape = 'u8[4096]{0}', space=vmem, size = 0x1000, scoped, tag = 'input window, operand 0']
    #allocation4 [shape = 's32[2]{0}', space=sflag, size = 0x8, scoped, tag = 'scoped memory for tpu_custom_call.1']
    #allocation5 [shape = 's32[2]{0}', space=sflag, size = 0x8, scoped, tag = 'scoped memory for tpu_custom_call.1']
    #allocation6 [shape = 'u8[32768]{0}', space=vmem, size = 0x8000, scoped, tag = 'input window, operand 1, single buffered']
    #allocation7 [shape = 's32[1]{0}', space=sflag, size = 0x4, scoped, tag = 'scoped memory for tpu_custom_call.1']
    #allocation8 [shape = 'u8[98304]{0}', space=vmem, size = 0x18000, scoped, tag = 'input window, operand 3, single buffered']
    #allocation9 [shape = 'u8[98304]{0}', space=vmem, size = 0x18000, scoped, tag = 'input window, operand 4, single buffered']
    #allocation10 [shape = 's32[1]{0}', space=sflag, size = 0x4, scoped, tag = 'scoped memory for tpu_custom_call.1']
    #allocation11 [shape = 'u8[32768]{0}', space=vmem, size = 0x8000, scoped, tag = 'input window, operand 6, single buffered']
    #allocation12 [shape = 'u8[8192]{0}', space=vmem, size = 0x2000, scoped, tag = 'output window, operand 0']
    %12 = vsyncpa [#allocation4], 0
    %s13 = scalar_lea.sflag [#allocation4], 1
    %14 = vsyncpa %s13, 0
    %15 = vsyncpa [#allocation7], 0
    %16 = vsyncpa [#allocation10], 0
    %17 = vsyncpa [#allocation5], 0
    %s18 = scalar_lea.sflag [#allocation5], 1
    %19 = vsyncpa %s18, 0
    loop: start=0, step=1, limit=4
    $region2: #{tpu_custom_call.1} parent=1 // loop_pre_header
      _
    $region3: #{tpu_custom_call.1} parent=1 // loop_header
      %s21 = sphi 0, %s25
      %p22 = scmp.ge.s32.totalorder %s21, 4
      %s28 = sphi 0, %s40
      %s29 = sphi 0, %s36
      %s30 = sphi 0, %s28
      %s31 = sphi 0, %s29
      %s32 = sphi 0, %s30
      %s33 = sphi 0, %s31
      %s43 = sphi 0, %s45
      %s46 = sphi 0, %s43
      %s47 = sphi 0, %s46
      %s63 = sphi 0, %s47
      %s67 = sphi 0, %s67
      %s69 = sphi 0, %s67
      %s70 = sphi 0, %s69
      %s84 = sphi 0, %s70
      %s88 = sphi 0, %s88
      %s90 = sphi 0, %s88
      %s91 = sphi 0, %s90
      %s105 = sphi 0, %s91
      %s109 = sphi 0, %s109
      %s111 = sphi 0, %s109
      %s112 = sphi 0, %s111
      %s126 = sphi 0, %s112
      %s130 = sphi 0, %s130
      %s132 = sphi 0, %s130
      %s133 = sphi 0, %s132
      %s147 = sphi 0, %s133
      %s151 = sphi 0, %s151
      %s153 = sphi 0, %s151
      %s154 = sphi 0, %s153
      %s168 = sphi 0, %s154
      %s174 = sphi 0, %s176
      %s177 = sphi 0, %s174
      %s178 = sphi 0, %s177
      %s194 = sphi 0, %s178
      %s202 = sphi 0, %s204
      %s205 = sphi 0, %s202
      %s206 = sphi 0, %s205
      %s222 = sphi 0, %s206
    $region4: #{tpu_custom_call.1} parent=1 // loop_header_branch
      %24 = sbr.rel (%p22) target = $region8
    $region5: #{tpu_custom_call.1} parent=1 // loop_body
      %s26 = ssub.s32 %s21, 1
      %s27 = ssub.s32 %s21, 2
      %s34 = sadd.s32 1, %s29
      %p35 = scmp.ge.s32.totalorder %s34, 1
      %s36 = scalar_select %p35, 0, %s34
      %s37 = sadd.s32 1, %s28
      %s38 = scalar_select %p35, %s37, %s28
      %p39 = scmp.ge.s32.totalorder %s38, 2
      %s40 = scalar_select %p39, 0, %s38
      %s41 = ssub.s32 %s28, %s40
      %p42 = scmp.eq.s32.totalorder %s41, 0
      %s44 = sadd.s32 %s43, 1
      %s45 = scalar_select %p42, %s43, %s44
      %p48 = pneg %p42
      %p49 = scmp.eq.s32.totalorder %s21, 1
      %p50 = por %p48, %p49
      %p51 = scmp.ne.s32.totalorder %s43, %s46
      %p52 = scmp.eq.s32.totalorder %s21, 0
      %p53 = por %p51, %p52
      %p54 = scmp.ne.s32.totalorder %s43, %s46
      %p55 = scmp.eq.s32.totalorder %s26, 1
      %p56 = por %p54, %p55
      %p57 = scmp.ne.s32.totalorder %s46, %s47
      %p58 = scmp.eq.s32.totalorder %s26, 0
      %p59 = por %p57, %p58
      %p60 = scmp.ne.s32.totalorder %s46, %s47
      %p61 = scmp.eq.s32.totalorder %s27, 1
      %p62 = por %p60, %p61
      %p64 = scmp.ne.s32.totalorder %s47, %s63
      %p65 = scmp.eq.s32.totalorder %s27, 0
      %p66 = por %p64, %p65
      %s68 = sadd.s32 %s67, 1
      %p71 = scmp.eq.s32.totalorder %s21, 1
      %p72 = scmp.ne.s32.totalorder %s67, %s69
      %p73 = scmp.eq.s32.totalorder %s21, 0
      %p74 = por %p72, %p73
      %p75 = scmp.ne.s32.totalorder %s67, %s69
      %p76 = scmp.eq.s32.totalorder %s26, 1
      %p77 = por %p75, %p76
      %p78 = scmp.ne.s32.totalorder %s69, %s70
      %p79 = scmp.eq.s32.totalorder %s26, 0
      %p80 = por %p78, %p79
      %p81 = scmp.ne.s32.totalorder %s69, %s70
      %p82 = scmp.eq.s32.totalorder %s27, 1
      %p83 = por %p81, %p82
      %p85 = scmp.ne.s32.totalorder %s70, %s84
      %p86 = scmp.eq.s32.totalorder %s27, 0
      %p87 = por %p85, %p86
      %s89 = sadd.s32 %s88, 1
      %p92 = scmp.eq.s32.totalorder %s21, 1
      %p93 = scmp.ne.s32.totalorder %s88, %s90
      %p94 = scmp.eq.s32.totalorder %s21, 0
      %p95 = por %p93, %p94
      %p96 = scmp.ne.s32.totalorder %s88, %s90
      %p97 = scmp.eq.s32.totalorder %s26, 1
      %p98 = por %p96, %p97
      %p99 = scmp.ne.s32.totalorder %s90, %s91
      %p100 = scmp.eq.s32.totalorder %s26, 0
      %p101 = por %p99, %p100
      %p102 = scmp.ne.s32.totalorder %s90, %s91
      %p103 = scmp.eq.s32.totalorder %s27, 1
      %p104 = por %p102, %p103
      %p106 = scmp.ne.s32.totalorder %s91, %s105
      %p107 = scmp.eq.s32.totalorder %s27, 0
      %p108 = por %p106, %p107
      %s110 = sadd.s32 %s109, 1
      %p113 = scmp.eq.s32.totalorder %s21, 1
      %p114 = scmp.ne.s32.totalorder %s109, %s111
      %p115 = scmp.eq.s32.totalorder %s21, 0
      %p116 = por %p114, %p115
      %p117 = scmp.ne.s32.totalorder %s109, %s111
      %p118 = scmp.eq.s32.totalorder %s26, 1
      %p119 = por %p117, %p118
      %p120 = scmp.ne.s32.totalorder %s111, %s112
      %p121 = scmp.eq.s32.totalorder %s26, 0
      %p122 = por %p120, %p121
      %p123 = scmp.ne.s32.totalorder %s111, %s112
      %p124 = scmp.eq.s32.totalorder %s27, 1
      %p125 = por %p123, %p124
      %p127 = scmp.ne.s32.totalorder %s112, %s126
      %p128 = scmp.eq.s32.totalorder %s27, 0
      %p129 = por %p127, %p128
      %s131 = sadd.s32 %s130, 1
      %p134 = scmp.eq.s32.totalorder %s21, 1
      %p135 = scmp.ne.s32.totalorder %s130, %s132
      %p136 = scmp.eq.s32.totalorder %s21, 0
      %p137 = por %p135, %p136
      %p138 = scmp.ne.s32.totalorder %s130, %s132
      %p139 = scmp.eq.s32.totalorder %s26, 1
      %p140 = por %p138, %p139
      %p141 = scmp.ne.s32.totalorder %s132, %s133
      %p142 = scmp.eq.s32.totalorder %s26, 0
      %p143 = por %p141, %p142
      %p144 = scmp.ne.s32.totalorder %s132, %s133
      %p145 = scmp.eq.s32.totalorder %s27, 1
      %p146 = por %p144, %p145
      %p148 = scmp.ne.s32.totalorder %s133, %s147
      %p149 = scmp.eq.s32.totalorder %s27, 0
      %p150 = por %p148, %p149
      %s152 = sadd.s32 %s151, 1
      %p155 = scmp.eq.s32.totalorder %s21, 1
      %p156 = scmp.ne.s32.totalorder %s151, %s153
      %p157 = scmp.eq.s32.totalorder %s21, 0
      %p158 = por %p156, %p157
      %p159 = scmp.ne.s32.totalorder %s151, %s153
      %p160 = scmp.eq.s32.totalorder %s26, 1
      %p161 = por %p159, %p160
      %p162 = scmp.ne.s32.totalorder %s153, %s154
      %p163 = scmp.eq.s32.totalorder %s26, 0
      %p164 = por %p162, %p163
      %p165 = scmp.ne.s32.totalorder %s153, %s154
      %p166 = scmp.eq.s32.totalorder %s27, 1
      %p167 = por %p165, %p166
      %p169 = scmp.ne.s32.totalorder %s154, %s168
      %p170 = scmp.eq.s32.totalorder %s27, 0
      %p171 = por %p169, %p170
      %s172 = ssub.s32 %s29, %s36
      %p173 = scmp.eq.s32.totalorder %s172, 0
      %s175 = sadd.s32 %s174, 1
      %s176 = scalar_select %p173, %s174, %s175
      %p179 = pneg %p173
      %p180 = scmp.eq.s32.totalorder %s21, 1
      %p181 = por %p179, %p180
      %p182 = scmp.ne.s32.totalorder %s174, %s177
      %p183 = scmp.eq.s32.totalorder %s21, 0
      %p184 = por %p182, %p183
      %p185 = scmp.ne.s32.totalorder %s174, %s177
      %p186 = scmp.eq.s32.totalorder %s26, 1
      %p187 = por %p185, %p186
      %p188 = scmp.ne.s32.totalorder %s177, %s178
      %p189 = scmp.eq.s32.totalorder %s26, 0
      %p190 = por %p188, %p189
      %p191 = scmp.ne.s32.totalorder %s177, %s178
      %p192 = scmp.eq.s32.totalorder %s27, 1
      %p193 = por %p191, %p192
      %p195 = scmp.ne.s32.totalorder %s178, %s194
      %p196 = scmp.eq.s32.totalorder %s27, 0
      %p197 = por %p195, %p196
      %s198 = ssub.s32 %s28, %s40
      %s199 = ssub.s32 %s29, %s36
      %s200 = sor.u32 %s198, %s199
      %p201 = scmp.eq.s32.totalorder %s200, 0
      %s203 = sadd.s32 %s202, 1
      %s204 = scalar_select %p201, %s202, %s203
      %p207 = pneg %p201
      %p208 = scmp.eq.s32.totalorder %s21, 1
      %p209 = por %p207, %p208
      %p210 = scmp.ne.s32.totalorder %s202, %s205
      %p211 = scmp.eq.s32.totalorder %s21, 0
      %p212 = por %p210, %p211
      %p213 = scmp.ne.s32.totalorder %s202, %s205
      %p214 = scmp.eq.s32.totalorder %s26, 1
      %p215 = por %p213, %p214
      %p216 = scmp.ne.s32.totalorder %s205, %s206
      %p217 = scmp.eq.s32.totalorder %s26, 0
      %p218 = por %p216, %p217
      %p219 = scmp.ne.s32.totalorder %s205, %s206
      %p220 = scmp.eq.s32.totalorder %s27, 1
      %p221 = por %p219, %p220
      %p223 = scmp.ne.s32.totalorder %s206, %s222
      %p224 = scmp.eq.s32.totalorder %s27, 0
      %p225 = por %p223, %p224
      %p226 = scmp.le.s32.totalorder 1, %s21
      %p227 = scmp.lt.s32.totalorder %s21, 3
      %p228 = pnand %p226, %p227
      %p229 = pneg %p228
      // Predicated region
      $region9: #{tpu_custom_call.1} parent=5 // pred_check
        _
      $region10: #{tpu_custom_call.1} parent=5 // pred_check_branch
        %231 = sbr.rel (%p228) target = $region12
      $region11: #{tpu_custom_call.1} parent=5 // pred_region
        %s232 = ssub.s32 %s21, 1
        // Predicated region
        $region13: #{tpu_custom_call.1} parent=11 // pred_check
          %p233 = pneg %p80
        $region14: #{tpu_custom_call.1} parent=11 // pred_check_branch
          %235 = sbr.rel (%p233) target = $region16
        $region15: #{tpu_custom_call.1} parent=11 // pred_region
          %s237 = ssub.s32 1024, 1024
          %238 = vsyncadd [#allocation7], %s237
          %s239 = sshll.u32 [#allocation6], 4
          %s240 = int_to_ptr.vmem [resolvable:$true] %s239
          %245 = dma.hbm_to_vmem [thread:$0]  %s1, 1024, %s240, [#allocation7], 64, 64, 4
        $region16: #{tpu_custom_call.1} parent=11 // pred_fallthru
          _
        // Predicated region
        $region17: #{tpu_custom_call.1} parent=11 // pred_check
          %p246 = pneg %p101
        $region18: #{tpu_custom_call.1} parent=11 // pred_check_branch
          %248 = sbr.rel (%p246) target = $region20
        $region19: #{tpu_custom_call.1} parent=11 // pred_region
          _
        $region20: #{tpu_custom_call.1} parent=11 // pred_fallthru
          _
        // Predicated region
        $region21: #{tpu_custom_call.1} parent=11 // pred_check
          %p249 = pneg %p122
        $region22: #{tpu_custom_call.1} parent=11 // pred_check_branch
          %251 = sbr.rel (%p249) target = $region24
        $region23: #{tpu_custom_call.1} parent=11 // pred_region
          %s253 = ssub.s32 3072, 3072
          %254 = vsyncadd [#allocation7], %s253
          %s255 = sshll.u32 [#allocation8], 4
          %s256 = int_to_ptr.vmem [resolvable:$true] %s255
          %261 = dma.hbm_to_vmem [thread:$0]  %s3, 3072, %s256, [#allocation7], 192, 192, 12
        $region24: #{tpu_custom_call.1} parent=11 // pred_fallthru
          _
        // Predicated region
        $region25: #{tpu_custom_call.1} parent=11 // pred_check
          %p262 = pneg %p143
        $region26: #{tpu_custom_call.1} parent=11 // pred_check_branch
          %264 = sbr.rel (%p262) target = $region28
        $region27: #{tpu_custom_call.1} parent=11 // pred_region
          %s266 = ssub.s32 3072, 3072
          %267 = vsyncadd [#allocation10], %s266
          %s268 = sshll.u32 [#allocation9], 4
          %s269 = int_to_ptr.vmem [resolvable:$true] %s268
          %274 = dma.hbm_to_vmem [thread:$0]  %s4, 3072, %s269, [#allocation10], 192, 192, 12
        $region28: #{tpu_custom_call.1} parent=11 // pred_fallthru
          _
        // Predicated region
        $region29: #{tpu_custom_call.1} parent=11 // pred_check
          %p275 = pneg %p164
        $region30: #{tpu_custom_call.1} parent=11 // pred_check_branch
          %277 = sbr.rel (%p275) target = $region32
        $region31: #{tpu_custom_call.1} parent=11 // pred_region
          _
        $region32: #{tpu_custom_call.1} parent=11 // pred_fallthru
          _
        // Predicated region
        $region33: #{tpu_custom_call.1} parent=11 // pred_check
          %p278 = pneg %p190
        $region34: #{tpu_custom_call.1} parent=11 // pred_check_branch
          %280 = sbr.rel (%p278) target = $region36
        $region35: #{tpu_custom_call.1} parent=11 // pred_region
          %s282 = ssub.s32 1024, 1024
          %283 = vsyncadd [#allocation10], %s282
          %s284 = smul.addr %s31, 64
          %s285 = scalar_lea.hbm %s6, %s284
          %s286 = sshll.u32 [#allocation11], 4
          %s287 = int_to_ptr.vmem [resolvable:$true] %s286
          %292 = dma.hbm_to_vmem [thread:$0]  %s285, 1024, %s287, [#allocation10], 64, 64, 4
        $region36: #{tpu_custom_call.1} parent=11 // pred_fallthru
          _
      $region12: #{tpu_custom_call.1} parent=5 // pred_fallthru
        _
      %p293 = scmp.lt.s32.totalorder %s21, 2
      // Predicated region
      $region37: #{tpu_custom_call.1} parent=5 // pred_check
        %p294 = pneg %p293
      $region38: #{tpu_custom_call.1} parent=5 // pred_check_branch
        %296 = sbr.rel (%p294) target = $region40
      $region39: #{tpu_custom_call.1} parent=5 // pred_region
        // Predicated region
        $region41: #{tpu_custom_call.1} parent=39 // pred_check
          %p297 = pneg %p53
        $region42: #{tpu_custom_call.1} parent=39 // pred_check_branch
          %299 = sbr.rel (%p297) target = $region44
        $region43: #{tpu_custom_call.1} parent=39 // pred_region
          %s300 = sand.u32 %s43, 1
          %s301 = scalar_lea.sflag [#allocation4], %s300
          %s302 = sand.u32 %s43, 1
          %s303 = smul.addr %s302, 4
          %s304 = scalar_lea.vmem [#allocation3], %s303
          %s306 = ssub.s32 64, 64
          %307 = vsyncadd %s301, %s306
          %s308 = smul.addr %s28, 64
          %s309 = scalar_lea.hbm %s0, %s308
          %s311 = sshll.u32 %s304, 4
          %s312 = int_to_ptr.vmem [resolvable:$true] %s311
          %314 = dma.hbm_to_vmem [thread:$0]  %s309, 64, %s312, %s301
        $region44: #{tpu_custom_call.1} parent=39 // pred_fallthru
          _
      $region40: #{tpu_custom_call.1} parent=5 // pred_fallthru
        _
      %p315 = scmp.le.s32.totalorder 1, %s21
      %p316 = scmp.lt.s32.totalorder %s21, 3
      %p317 = pnand %p315, %p316
      %p318 = pneg %p317
      // Predicated region
      $region45: #{tpu_custom_call.1} parent=5 // pred_check
        _
      $region46: #{tpu_custom_call.1} parent=5 // pred_check_branch
        %320 = sbr.rel (%p317) target = $region48
      $region47: #{tpu_custom_call.1} parent=5 // pred_region
        %s321 = ssub.s32 %s21, 1
        %s322 = sand.u32 %s46, 1
        %s323 = scalar_lea.sflag [#allocation4], %s322
        %s324 = sand.u32 %s46, 1
        %s325 = smul.addr %s324, 4
        %s326 = scalar_lea.vmem [#allocation3], %s325
        // Predicated region
        $region49: #{tpu_custom_call.1} parent=47 // pred_check
          %p327 = pneg %p59
        $region50: #{tpu_custom_call.1} parent=47 // pred_check_branch
          %329 = sbr.rel (%p327) target = $region52
        $region51: #{tpu_custom_call.1} parent=47 // pred_region
          %330 = dma.done %s323, 64
        $region52: #{tpu_custom_call.1} parent=47 // pred_fallthru
          _
        // Predicated region
        $region53: #{tpu_custom_call.1} parent=47 // pred_check
          %p331 = pneg %p80
        $region54: #{tpu_custom_call.1} parent=47 // pred_check_branch
          %333 = sbr.rel (%p331) target = $region56
        $region55: #{tpu_custom_call.1} parent=47 // pred_region
          %334 = dma.done [#allocation7], 1024
        $region56: #{tpu_custom_call.1} parent=47 // pred_fallthru
          _
        // Predicated region
        $region57: #{tpu_custom_call.1} parent=47 // pred_check
          %p335 = pneg %p122
        $region58: #{tpu_custom_call.1} parent=47 // pred_check_branch
          %337 = sbr.rel (%p335) target = $region60
        $region59: #{tpu_custom_call.1} parent=47 // pred_region
          %338 = dma.done [#allocation7], 3072
        $region60: #{tpu_custom_call.1} parent=47 // pred_fallthru
          _
        // Predicated region
        $region61: #{tpu_custom_call.1} parent=47 // pred_check
          %p339 = pneg %p143
        $region62: #{tpu_custom_call.1} parent=47 // pred_check_branch
          %341 = sbr.rel (%p339) target = $region64
        $region63: #{tpu_custom_call.1} parent=47 // pred_region
          %342 = dma.done [#allocation10], 3072
        $region64: #{tpu_custom_call.1} parent=47 // pred_fallthru
          _
        // Predicated region
        $region65: #{tpu_custom_call.1} parent=47 // pred_check
          %p343 = pneg %p190
        $region66: #{tpu_custom_call.1} parent=47 // pred_check_branch
          %345 = sbr.rel (%p343) target = $region68
        $region67: #{tpu_custom_call.1} parent=47 // pred_region
          %346 = dma.done [#allocation10], 1024
        $region68: #{tpu_custom_call.1} parent=47 // pred_fallthru
          _
        %s347 = sand.u32 %s46, 1
        %s348 = scalar_lea.sflag [#allocation4], %s347
        %s349 = sand.u32 %s46, 1
        %s350 = smul.addr %s349, 4
        %s351 = scalar_lea.vmem [#allocation3], %s350
        %p352 = pneg %p59
        %p353 = pneg %p56
        %p354 = pneg %p80
        %p355 = pneg %p77
        %p356 = pneg %p101
        %p357 = pneg %p98
        %p358 = pneg %p122
        %p359 = pneg %p119
        %p360 = pneg %p143
        %p361 = pneg %p140
        %p362 = pneg %p164
        %p363 = pneg %p161
        %p364 = pneg %p190
        %p365 = pneg %p187
        %p366 = pneg %p218
        %p367 = pneg %p215
        %s368 = sand.u32 %s205, 1
        %s369 = scalar_lea.sflag [#allocation5], %s368
        %s370 = sand.u32 %s205, 1
        %s371 = smul.addr %s370, 8
        %s372 = scalar_lea.vmem [#allocation12], %s371
        %p374 = scmp.eq.s32.totalorder %s31, 0
        // Predicated region
        $region69: #{tpu_custom_call.1} parent=47 // pred_check
          %p375 = pneg %p374
        $region70: #{tpu_custom_call.1} parent=47 // pred_check_branch
          %377 = sbr.rel (%p375) target = $region72
        $region71: #{tpu_custom_call.1} parent=47 // pred_region
          %v378 = vld [vmem:[%s326] sm:$0xf]
          %v379 = vld [vmem:[#allocation6] sm:$0xf]
          %v380 = vld [vmem:[#allocation6 + $0x4] sm:$0xf]
          %v381 = vld [vmem:[#allocation6 + $0x8] sm:$0xf]
          %v382 = vld [vmem:[#allocation6 + $0xc] sm:$0xf]
          %v383 = vld [vmem:[#allocation6 + $0x10] sm:$0xf]
          %v384 = vld [vmem:[#allocation6 + $0x14] sm:$0xf]
          %v385 = vld [vmem:[#allocation6 + $0x18] sm:$0xf]
          %v386 = vld [vmem:[#allocation6 + $0x1c] sm:$0xf]
          %v387 = vld [vmem:[#allocation6 + $0x20] sm:$0xf]
          %v388 = vld [vmem:[#allocation6 + $0x24] sm:$0xf]
          %v389 = vld [vmem:[#allocation6 + $0x28] sm:$0xf]
          %v390 = vld [vmem:[#allocation6 + $0x2c] sm:$0xf]
          %v391 = vld [vmem:[#allocation6 + $0x30] sm:$0xf]
          %v392 = vld [vmem:[#allocation6 + $0x34] sm:$0xf]
          %v393 = vld [vmem:[#allocation6 + $0x38] sm:$0xf]
          %v394 = vld [vmem:[#allocation6 + $0x3c] sm:$0xf]
          %v395 = vld [vmem:[%s2] sm:$0x1]
          %v397 = vlaneseq
          %v398 = vshrl.u32 %v397, 7
          %v399 = vsub.s32 0, %v398
          %v400 = vrot.slane %v395, %v399
          %v418 = vunpack.c.l.b16 %v379
          %v419 = vunpack.c.l.b16 %v380
          %v420 = vunpack.c.l.b16 %v381
          %v421 = vunpack.c.l.b16 %v382
          %v422 = vunpack.c.l.b16 %v383
          %v423 = vunpack.c.l.b16 %v384
          %v424 = vunpack.c.l.b16 %v385
          %v425 = vunpack.c.l.b16 %v386
          %v426 = vunpack.c.l.b16 %v387
          %v427 = vunpack.c.l.b16 %v388
          %v428 = vunpack.c.l.b16 %v389
          %v429 = vunpack.c.l.b16 %v390
          %v430 = vunpack.c.l.b16 %v391
          %v431 = vunpack.c.l.b16 %v392
          %v432 = vunpack.c.l.b16 %v393
          %v433 = vunpack.c.l.b16 %v394
          %v434 = vpack.c.b16 %v419, %v418
          %v435 = vpack.c.b16 %v421, %v420
          %v436 = vpack.c.b16 %v423, %v422
          %v437 = vpack.c.b16 %v425, %v424
          %v438 = vpack.c.b16 %v427, %v426
          %v439 = vpack.c.b16 %v429, %v428
          %v440 = vpack.c.b16 %v431, %v430
          %v441 = vpack.c.b16 %v433, %v432
          %450 = vmatprep.subr.bf16.mxu0 0
          %451 = vmatpush1.bf16.msra.mxu0 %v434
          %452 = vmatprep.subr.bf16.mxu0 0
          %453 = vmatpush1.bf16.msra.mxu0 %v435
          %454 = vmatprep.subr.bf16.mxu0 0
          %455 = vmatpush1.bf16.msra.mxu0 %v436
          %456 = vmatprep.subr.bf16.mxu0 0
          %457 = vmatpush1.bf16.msra.mxu0 %v437
          %458 = vmatprep.subr.bf16.mxu0 0
          %459 = vmatpush1.bf16.msra.mxu0 %v438
          %460 = vmatprep.subr.bf16.mxu0 0
          %461 = vmatpush1.bf16.msra.mxu0 %v439
          %462 = vmatprep.subr.bf16.mxu0 0
          %463 = vmatpush1.bf16.msra.mxu0 %v440
          %464 = vmatprep.subr.bf16.mxu0 0
          %465 = vmatpush1.bf16.msra.mxu0 %v441
          %466 = vmatprep.subr.bf16.mxu0 0
          %467 = vmatpush1.bf16.msra.mxu0 0
          %468 = vmatprep.subr.bf16.mxu0 0
          %469 = vmatpush1.bf16.msra.mxu0 0
          %470 = vmatprep.subr.bf16.mxu0 0
          %471 = vmatpush1.bf16.msra.mxu0 0
          %472 = vmatprep.subr.bf16.mxu0 0
          %473 = vmatpush1.bf16.msra.mxu0 0
          %474 = vmatprep.subr.bf16.mxu0 0
          %475 = vmatpush1.bf16.msra.mxu0 0
          %476 = vmatprep.subr.bf16.mxu0 0
          %477 = vmatpush1.bf16.msra.mxu0 0
          %478 = vmatprep.subr.bf16.mxu0 0
          %479 = vmatpush1.bf16.msra.mxu0 0
          %480 = vmatprep.subr.bf16.mxu0 0
          %481 = vmatpush1.bf16.msra.mxu0 0
          %482 = vmatprep.mubr.bf16.mxu0 0
          %483 = vmatmul.mubr.bf16.gmra.mrb[0].mxu0 %v378
          %v484 = vpop.f32.mrb[0].mxu0
          %v485 = vadd.f32 %v400, %v484
          %v486 = vpop.f32.mrb[0].mxu0
          %v487 = vpop.f32.mrb[0].mxu0
          %v488 = vpop.f32.mrb[0].mxu0
          %489 = vdwg.mxu0
          %v490 = vxor.u32 %v485, 2147483648
          %v491 = vmul.f32 %v490, 1.442695
          %v492 = vpow.pop %v491
          %v493 = vadd.f32 %v492, 1.0
          %v494 = vrcp.pop %v493
          %v495 = vmul.f32 1.0, %v494
          %v496 = vld [vmem:[#allocation8] sm:$0xff]
          %v497 = vld [vmem:[#allocation8 + $0x8] sm:$0xf]
          %v498 = vld [vmem:[#allocation8 + $0xc] sm:$0xff]
          %v499 = vld [vmem:[#allocation8 + $0x14] sm:$0xf]
          %v500 = vld [vmem:[#allocation8 + $0x18] sm:$0xff]
          %v501 = vld [vmem:[#allocation8 + $0x20] sm:$0xf]
          %v502 = vld [vmem:[#allocation8 + $0x24] sm:$0xff]
          %v503 = vld [vmem:[#allocation8 + $0x2c] sm:$0xf]
          %v504 = vld [vmem:[#allocation8 + $0x30] sm:$0xff]
          %v505 = vld [vmem:[#allocation8 + $0x38] sm:$0xf]
          %v506 = vld [vmem:[#allocation8 + $0x3c] sm:$0xff]
          %v507 = vld [vmem:[#allocation8 + $0x44] sm:$0xf]
          %v508 = vld [vmem:[#allocation8 + $0x48] sm:$0xff]
          %v509 = vld [vmem:[#allocation8 + $0x50] sm:$0xf]
          %v510 = vld [vmem:[#allocation8 + $0x54] sm:$0xff]
          %v511 = vld [vmem:[#allocation8 + $0x5c] sm:$0xf]
          %v512 = vld [vmem:[#allocation8 + $0x60] sm:$0xff]
          %v513 = vld [vmem:[#allocation8 + $0x68] sm:$0xf]
          %v514 = vld [vmem:[#allocation8 + $0x6c] sm:$0xff]
          %v515 = vld [vmem:[#allocation8 + $0x74] sm:$0xf]
          %v516 = vld [vmem:[#allocation8 + $0x78] sm:$0xff]
          %v517 = vld [vmem:[#allocation8 + $0x80] sm:$0xf]
          %v518 = vld [vmem:[#allocation8 + $0x84] sm:$0xff]
          %v519 = vld [vmem:[#allocation8 + $0x8c] sm:$0xf]
          %v520 = vld [vmem:[#allocation8 + $0x90] sm:$0xff]
          %v521 = vld [vmem:[#allocation8 + $0x98] sm:$0xf]
          %v522 = vld [vmem:[#allocation8 + $0x9c] sm:$0xff]
          %v523 = vld [vmem:[#allocation8 + $0xa4] sm:$0xf]
          %v524 = vld [vmem:[#allocation8 + $0xa8] sm:$0xff]
          %v525 = vld [vmem:[#allocation8 + $0xb0] sm:$0xf]
          %v526 = vld [vmem:[#allocation8 + $0xb4] sm:$0xff]
          %v527 = vld [vmem:[#allocation8 + $0xbc] sm:$0xf]
          %v560 = vunpack.c.l.b16 %v496
          %v561 = vunpack.c.h.b16 %v496
          %v562 = vunpack.c.l.b16 %v497
          %v563 = vunpack.c.l.b16 %v498
          %v564 = vunpack.c.h.b16 %v498
          %v565 = vunpack.c.l.b16 %v499
          %v566 = vunpack.c.l.b16 %v500
          %v567 = vunpack.c.h.b16 %v500
          %v568 = vunpack.c.l.b16 %v501
          %v569 = vunpack.c.l.b16 %v502
          %v570 = vunpack.c.h.b16 %v502
          %v571 = vunpack.c.l.b16 %v503
          %v572 = vunpack.c.l.b16 %v504
          %v573 = vunpack.c.h.b16 %v504
          %v574 = vunpack.c.l.b16 %v505
          %v575 = vunpack.c.l.b16 %v506
          %v576 = vunpack.c.h.b16 %v506
          %v577 = vunpack.c.l.b16 %v507
          %v578 = vunpack.c.l.b16 %v508
          %v579 = vunpack.c.h.b16 %v508
          %v580 = vunpack.c.l.b16 %v509
          %v581 = vunpack.c.l.b16 %v510
          %v582 = vunpack.c.h.b16 %v510
          %v583 = vunpack.c.l.b16 %v511
          %v584 = vunpack.c.l.b16 %v512
          %v585 = vunpack.c.h.b16 %v512
          %v586 = vunpack.c.l.b16 %v513
          %v587 = vunpack.c.l.b16 %v514
          %v588 = vunpack.c.h.b16 %v514
          %v589 = vunpack.c.l.b16 %v515
          %v590 = vunpack.c.l.b16 %v516
          %v591 = vunpack.c.h.b16 %v516
          %v592 = vunpack.c.l.b16 %v517
          %v593 = vunpack.c.l.b16 %v518
          %v594 = vunpack.c.h.b16 %v518
          %v595 = vunpack.c.l.b16 %v519
          %v596 = vunpack.c.l.b16 %v520
          %v597 = vunpack.c.h.b16 %v520
          %v598 = vunpack.c.l.b16 %v521
          %v599 = vunpack.c.l.b16 %v522
          %v600 = vunpack.c.h.b16 %v522
          %v601 = vunpack.c.l.b16 %v523
          %v602 = vunpack.c.l.b16 %v524
          %v603 = vunpack.c.h.b16 %v524
          %v604 = vunpack.c.l.b16 %v525
          %v605 = vunpack.c.l.b16 %v526
          %v606 = vunpack.c.h.b16 %v526
          %v607 = vunpack.c.l.b16 %v527
          %v608 = vpack.c.b16 %v563, %v560
          %v609 = vpack.c.b16 %v564, %v561
          %v610 = vpack.c.b16 %v565, %v562
          %v611 = vpack.c.b16 %v569, %v566
          %v612 = vpack.c.b16 %v570, %v567
          %v613 = vpack.c.b16 %v571, %v568
          %v614 = vpack.c.b16 %v575, %v572
          %v615 = vpack.c.b16 %v576, %v573
          %v616 = vpack.c.b16 %v577, %v574
          %v617 = vpack.c.b16 %v581, %v578
          %v618 = vpack.c.b16 %v582, %v579
          %v619 = vpack.c.b16 %v583, %v580
          %v620 = vpack.c.b16 %v587, %v584
          %v621 = vpack.c.b16 %v588, %v585
          %v622 = vpack.c.b16 %v589, %v586
          %v623 = vpack.c.b16 %v593, %v590
          %v624 = vpack.c.b16 %v594, %v591
          %v625 = vpack.c.b16 %v595, %v592
          %v626 = vpack.c.b16 %v599, %v596
          %v627 = vpack.c.b16 %v600, %v597
          %v628 = vpack.c.b16 %v601, %v598
          %v629 = vpack.c.b16 %v605, %v602
          %v630 = vpack.c.b16 %v606, %v603
          %v631 = vpack.c.b16 %v607, %v604
          %656 = vmatprep.subr.bf16.mxu0 %v609
          %657 = vmatpush1.bf16.msra.mxu0 %v608
          %658 = vmatprep.subr.bf16.mxu0 %v612
          %659 = vmatpush1.bf16.msra.mxu0 %v611
          %660 = vmatprep.subr.bf16.mxu0 %v615
          %661 = vmatpush1.bf16.msra.mxu0 %v614
          %662 = vmatprep.subr.bf16.mxu0 %v618
          %663 = vmatpush1.bf16.msra.mxu0 %v617
          %664 = vmatprep.subr.bf16.mxu0 %v621
          %665 = vmatpush1.bf16.msra.mxu0 %v620
          %666 = vmatprep.subr.bf16.mxu0 %v624
          %667 = vmatpush1.bf16.msra.mxu0 %v623
          %668 = vmatprep.subr.bf16.mxu0 %v627
          %669 = vmatpush1.bf16.msra.mxu0 %v626
          %670 = vmatprep.subr.bf16.mxu0 %v630
          %671 = vmatpush1.bf16.msra.mxu0 %v629
          %672 = vmatprep.subr.bf16.mxu0 0
          %673 = vmatpush1.bf16.msra.mxu0 0
          %674 = vmatprep.subr.bf16.mxu0 0
          %675 = vmatpush1.bf16.msra.mxu0 0
          %676 = vmatprep.subr.bf16.mxu0 0
          %677 = vmatpush1.bf16.msra.mxu0 0
          %678 = vmatprep.subr.bf16.mxu0 0
          %679 = vmatpush1.bf16.msra.mxu0 0
          %680 = vmatprep.subr.bf16.mxu0 0
          %681 = vmatpush1.bf16.msra.mxu0 0
          %682 = vmatprep.subr.bf16.mxu0 0
          %683 = vmatpush1.bf16.msra.mxu0 0
          %684 = vmatprep.subr.bf16.mxu0 0
          %685 = vmatpush1.bf16.msra.mxu0 0
          %686 = vmatprep.subr.bf16.mxu0 0
          %687 = vmatpush1.bf16.msra.mxu0 0
          %688 = vmatprep.mubr.bf16.mxu0 0
          %689 = vmatmul.mubr.bf16.gmra.mrb[0].mxu0 %v378
          %v690 = vpop.f32.mrb[0].mxu0
          %v691 = vadd.f32 0.0, %v690
          %v692 = vpop.f32.mrb[0].mxu0
          %v693 = vadd.f32 0.0, %v692
          %v694 = vpop.f32.mrb[0].mxu0
          %v695 = vpop.f32.mrb[0].mxu0
          %696 = vdwg.mxu0
          %697 = vmatprep.subr.bf16.mxu0 0
          %698 = vmatpush1.bf16.msra.mxu0 %v610
          %699 = vmatprep.subr.bf16.mxu0 0
          %700 = vmatpush1.bf16.msra.mxu0 %v613
          %701 = vmatprep.subr.bf16.mxu0 0
          %702 = vmatpush1.bf16.msra.mxu0 %v616
          %703 = vmatprep.subr.bf16.mxu0 0
          %704 = vmatpush1.bf16.msra.mxu0 %v619
          %705 = vmatprep.subr.bf16.mxu0 0
          %706 = vmatpush1.bf16.msra.mxu0 %v622
          %707 = vmatprep.subr.bf16.mxu0 0
          %708 = vmatpush1.bf16.msra.mxu0 %v625
          %709 = vmatprep.subr.bf16.mxu0 0
          %710 = vmatpush1.bf16.msra.mxu0 %v628
          %711 = vmatprep.subr.bf16.mxu0 0
          %712 = vmatpush1.bf16.msra.mxu0 %v631
          %713 = vmatprep.subr.bf16.mxu0 0
          %714 = vmatpush1.bf16.msra.mxu0 0
          %715 = vmatprep.subr.bf16.mxu0 0
          %716 = vmatpush1.bf16.msra.mxu0 0
          %717 = vmatprep.subr.bf16.mxu0 0
          %718 = vmatpush1.bf16.msra.mxu0 0
          %719 = vmatprep.subr.bf16.mxu0 0
          %720 = vmatpush1.bf16.msra.mxu0 0
          %721 = vmatprep.subr.bf16.mxu0 0
          %722 = vmatpush1.bf16.msra.mxu0 0
          %723 = vmatprep.subr.bf16.mxu0 0
          %724 = vmatpush1.bf16.msra.mxu0 0
          %725 = vmatprep.subr.bf16.mxu0 0
          %726 = vmatpush1.bf16.msra.mxu0 0
          %727 = vmatprep.subr.bf16.mxu0 0
          %728 = vmatpush1.bf16.msra.mxu0 0
          %729 = vmatprep.mubr.bf16.mxu0 0
          %730 = vmatmul.mubr.bf16.gmra.mrb[0].mxu0 %v378
          %v731 = vpop.f32.mrb[0].mxu0
          %v732 = vadd.f32 0.0, %v731
          %v733 = vpop.f32.mrb[0].mxu0
          %v734 = vpop.f32.mrb[0].mxu0
          %v735 = vpop.f32.mrb[0].mxu0
          %736 = vdwg.mxu0
          %v737 = vpack.c.bf16 %v495, %v495
          %v738 = vld [vmem:[#allocation9] sm:$0xff]
          %v739 = vld [vmem:[#allocation9 + $0x8] sm:$0xf]
          %v740 = vld [vmem:[#allocation9 + $0xc] sm:$0xff]
          %v741 = vld [vmem:[#allocation9 + $0x14] sm:$0xf]
          %v742 = vld [vmem:[#allocation9 + $0x18] sm:$0xff]
          %v743 = vld [vmem:[#allocation9 + $0x20] sm:$0xf]
          %v744 = vld [vmem:[#allocation9 + $0x24] sm:$0xff]
          %v745 = vld [vmem:[#allocation9 + $0x2c] sm:$0xf]
          %v746 = vld [vmem:[#allocation9 + $0x30] sm:$0xff]
          %v747 = vld [vmem:[#allocation9 + $0x38] sm:$0xf]
          %v748 = vld [vmem:[#allocation9 + $0x3c] sm:$0xff]
          %v749 = vld [vmem:[#allocation9 + $0x44] sm:$0xf]
          %v750 = vld [vmem:[#allocation9 + $0x48] sm:$0xff]
          %v751 = vld [vmem:[#allocation9 + $0x50] sm:$0xf]
          %v752 = vld [vmem:[#allocation9 + $0x54] sm:$0xff]
          %v753 = vld [vmem:[#allocation9 + $0x5c] sm:$0xf]
          %v754 = vld [vmem:[#allocation9 + $0x60] sm:$0xff]
          %v755 = vld [vmem:[#allocation9 + $0x68] sm:$0xf]
          %v756 = vld [vmem:[#allocation9 + $0x6c] sm:$0xff]
          %v757 = vld [vmem:[#allocation9 + $0x74] sm:$0xf]
          %v758 = vld [vmem:[#allocation9 + $0x78] sm:$0xff]
          %v759 = vld [vmem:[#allocation9 + $0x80] sm:$0xf]
          %v760 = vld [vmem:[#allocation9 + $0x84] sm:$0xff]
          %v761 = vld [vmem:[#allocation9 + $0x8c] sm:$0xf]
          %v762 = vld [vmem:[#allocation9 + $0x90] sm:$0xff]
          %v763 = vld [vmem:[#allocation9 + $0x98] sm:$0xf]
          %v764 = vld [vmem:[#allocation9 + $0x9c] sm:$0xff]
          %v765 = vld [vmem:[#allocation9 + $0xa4] sm:$0xf]
          %v766 = vld [vmem:[#allocation9 + $0xa8] sm:$0xff]
          %v767 = vld [vmem:[#allocation9 + $0xb0] sm:$0xf]
          %v768 = vld [vmem:[#allocation9 + $0xb4] sm:$0xff]
          %v769 = vld [vmem:[#allocation9 + $0xbc] sm:$0xf]
          %v802 = vunpack.c.l.b16 %v738
          %v803 = vunpack.c.h.b16 %v738
          %v804 = vunpack.c.l.b16 %v739
          %v805 = vunpack.c.l.b16 %v740
          %v806 = vunpack.c.h.b16 %v740
          %v807 = vunpack.c.l.b16 %v741
          %v808 = vunpack.c.l.b16 %v742
          %v809 = vunpack.c.h.b16 %v742
          %v810 = vunpack.c.l.b16 %v743
          %v811 = vunpack.c.l.b16 %v744
          %v812 = vunpack.c.h.b16 %v744
          %v813 = vunpack.c.l.b16 %v745
          %v814 = vunpack.c.l.b16 %v746
          %v815 = vunpack.c.h.b16 %v746
          %v816 = vunpack.c.l.b16 %v747
          %v817 = vunpack.c.l.b16 %v748
          %v818 = vunpack.c.h.b16 %v748
          %v819 = vunpack.c.l.b16 %v749
          %v820 = vunpack.c.l.b16 %v750
          %v821 = vunpack.c.h.b16 %v750
          %v822 = vunpack.c.l.b16 %v751
          %v823 = vunpack.c.l.b16 %v752
          %v824 = vunpack.c.h.b16 %v752
          %v825 = vunpack.c.l.b16 %v753
          %v826 = vunpack.c.l.b16 %v754
          %v827 = vunpack.c.h.b16 %v754
          %v828 = vunpack.c.l.b16 %v755
          %v829 = vunpack.c.l.b16 %v756
          %v830 = vunpack.c.h.b16 %v756
          %v831 = vunpack.c.l.b16 %v757
          %v832 = vunpack.c.l.b16 %v758
          %v833 = vunpack.c.h.b16 %v758
          %v834 = vunpack.c.l.b16 %v759
          %v835 = vunpack.c.l.b16 %v760
          %v836 = vunpack.c.h.b16 %v760
          %v837 = vunpack.c.l.b16 %v761
          %v838 = vunpack.c.l.b16 %v762
          %v839 = vunpack.c.h.b16 %v762
          %v840 = vunpack.c.l.b16 %v763
          %v841 = vunpack.c.l.b16 %v764
          %v842 = vunpack.c.h.b16 %v764
          %v843 = vunpack.c.l.b16 %v765
          %v844 = vunpack.c.l.b16 %v766
          %v845 = vunpack.c.h.b16 %v766
          %v846 = vunpack.c.l.b16 %v767
          %v847 = vunpack.c.l.b16 %v768
          %v848 = vunpack.c.h.b16 %v768
          %v849 = vunpack.c.l.b16 %v769
          %v850 = vpack.c.b16 %v805, %v802
          %v851 = vpack.c.b16 %v806, %v803
          %v852 = vpack.c.b16 %v807, %v804
          %v853 = vpack.c.b16 %v811, %v808
          %v854 = vpack.c.b16 %v812, %v809
          %v855 = vpack.c.b16 %v813, %v810
          %v856 = vpack.c.b16 %v817, %v814
          %v857 = vpack.c.b16 %v818, %v815
          %v858 = vpack.c.b16 %v819, %v816
          %v859 = vpack.c.b16 %v823, %v820
          %v860 = vpack.c.b16 %v824, %v821
          %v861 = vpack.c.b16 %v825, %v822
          %v862 = vpack.c.b16 %v829, %v826
          %v863 = vpack.c.b16 %v830, %v827
          %v864 = vpack.c.b16 %v831, %v828
          %v865 = vpack.c.b16 %v835, %v832
          %v866 = vpack.c.b16 %v836, %v833
          %v867 = vpack.c.b16 %v837, %v834
          %v868 = vpack.c.b16 %v841, %v838
          %v869 = vpack.c.b16 %v842, %v839
          %v870 = vpack.c.b16 %v843, %v840
          %v871 = vpack.c.b16 %v847, %v844
          %v872 = vpack.c.b16 %v848, %v845
          %v873 = vpack.c.b16 %v849, %v846
          %898 = vmatprep.subr.bf16.mxu0 %v851
          %899 = vmatpush1.bf16.msra.mxu0 %v850
          %900 = vmatprep.subr.bf16.mxu0 %v854
          %901 = vmatpush1.bf16.msra.mxu0 %v853
          %902 = vmatprep.subr.bf16.mxu0 %v857
          %903 = vmatpush1.bf16.msra.mxu0 %v856
          %904 = vmatprep.subr.bf16.mxu0 %v860
          %905 = vmatpush1.bf16.msra.mxu0 %v859
          %906 = vmatprep.subr.bf16.mxu0 %v863
          %907 = vmatpush1.bf16.msra.mxu0 %v862
          %908 = vmatprep.subr.bf16.mxu0 %v866
          %909 = vmatpush1.bf16.msra.mxu0 %v865
          %910 = vmatprep.subr.bf16.mxu0 %v869
          %911 = vmatpush1.bf16.msra.mxu0 %v868
          %912 = vmatprep.subr.bf16.mxu0 %v872
          %913 = vmatpush1.bf16.msra.mxu0 %v871
          %914 = vmatprep.subr.bf16.mxu0 0
          %915 = vmatpush1.bf16.msra.mxu0 0
          %916 = vmatprep.subr.bf16.mxu0 0
          %917 = vmatpush1.bf16.msra.mxu0 0
          %918 = vmatprep.subr.bf16.mxu0 0
          %919 = vmatpush1.bf16.msra.mxu0 0
          %920 = vmatprep.subr.bf16.mxu0 0
          %921 = vmatpush1.bf16.msra.mxu0 0
          %922 = vmatprep.subr.bf16.mxu0 0
          %923 = vmatpush1.bf16.msra.mxu0 0
          %924 = vmatprep.subr.bf16.mxu0 0
          %925 = vmatpush1.bf16.msra.mxu0 0
          %926 = vmatprep.subr.bf16.mxu0 0
          %927 = vmatpush1.bf16.msra.mxu0 0
          %928 = vmatprep.subr.bf16.mxu0 0
          %929 = vmatpush1.bf16.msra.mxu0 0
          %930 = vmatprep.mubr.bf16.mxu0 0
          %931 = vmatmul.mubr.bf16.gmra.mrb[0].mxu0 %v737
          %v932 = vpop.f32.mrb[0].mxu0
          %v933 = vadd.f32 0.0, %v932
          %v934 = vpop.f32.mrb[0].mxu0
          %v935 = vadd.f32 0.0, %v934
          %v936 = vpop.f32.mrb[0].mxu0
          %v937 = vpop.f32.mrb[0].mxu0
          %938 = vdwg.mxu0
          %939 = vmatprep.subr.bf16.mxu0 0
          %940 = vmatpush1.bf16.msra.mxu0 %v852
          %941 = vmatprep.subr.bf16.mxu0 0
          %942 = vmatpush1.bf16.msra.mxu0 %v855
          %943 = vmatprep.subr.bf16.mxu0 0
          %944 = vmatpush1.bf16.msra.mxu0 %v858
          %945 = vmatprep.subr.bf16.mxu0 0
          %946 = vmatpush1.bf16.msra.mxu0 %v861
          %947 = vmatprep.subr.bf16.mxu0 0
          %948 = vmatpush1.bf16.msra.mxu0 %v864
          %949 = vmatprep.subr.bf16.mxu0 0
          %950 = vmatpush1.bf16.msra.mxu0 %v867
          %951 = vmatprep.subr.bf16.mxu0 0
          %952 = vmatpush1.bf16.msra.mxu0 %v870
          %953 = vmatprep.subr.bf16.mxu0 0
          %954 = vmatpush1.bf16.msra.mxu0 %v873
          %955 = vmatprep.subr.bf16.mxu0 0
          %956 = vmatpush1.bf16.msra.mxu0 0
          %957 = vmatprep.subr.bf16.mxu0 0
          %958 = vmatpush1.bf16.msra.mxu0 0
          %959 = vmatprep.subr.bf16.mxu0 0
          %960 = vmatpush1.bf16.msra.mxu0 0
          %961 = vmatprep.subr.bf16.mxu0 0
          %962 = vmatpush1.bf16.msra.mxu0 0
          %963 = vmatprep.subr.bf16.mxu0 0
          %964 = vmatpush1.bf16.msra.mxu0 0
          %965 = vmatprep.subr.bf16.mxu0 0
          %966 = vmatpush1.bf16.msra.mxu0 0
          %967 = vmatprep.subr.bf16.mxu0 0
          %968 = vmatpush1.bf16.msra.mxu0 0
          %969 = vmatprep.subr.bf16.mxu0 0
          %970 = vmatpush1.bf16.msra.mxu0 0
          %971 = vmatprep.mubr.bf16.mxu0 0
          %972 = vmatmul.mubr.bf16.gmra.mrb[0].mxu0 %v737
          %v973 = vpop.f32.mrb[0].mxu0
          %v974 = vadd.f32 0.0, %v973
          %v975 = vpop.f32.mrb[0].mxu0
          %v976 = vpop.f32.mrb[0].mxu0
          %v977 = vpop.f32.mrb[0].mxu0
          %978 = vdwg.mxu0
          %v979 = vmul.f32 %v691, %v933
          %v980 = vmul.f32 %v693, %v935
          %v981 = vadd.f32 %v979, %v980
          %v982 = vmul.f32 %v732, %v974
          %v983 = vadd.f32 %v981, %v982
          %v984 = vld [vmem:[%s5] sm:$0x1]
          %v986 = vlaneseq
          %v987 = vshrl.u32 %v986, 7
          %v988 = vsub.s32 0, %v987
          %v989 = vrot.slane %v984, %v988
          %v991 = vadd.f32 %v983, %v989
          %992 = vmax.xlane.f32.xlu0 %v991
          %v993 = vpop.xlane.xlu0 %992
          %v994 = vsub.f32 %v991, %v993
          %v995 = vmul.f32 %v994, 1.442695
          %v996 = vpow.pop %v995
          %997 = vadd.xlane.f32.xlu0 %v996
          %v998 = vpop.xlane.xlu0 %997
          %v999 = vrcp.pop %v998
          %v1000 = vmul.f32 %v996, %v999
          %v1001 = vpack.c.bf16 %v1000, %v1000
          %1002 = vst [vmem:[#allocation2] sm:$0xf] %v1001
        $region72: #{tpu_custom_call.1} parent=47 // pred_fallthru
          _
        %v1003 = vld [vmem:[#allocation2] sm:$0xf]
        %v1004 = vld [vmem:[#allocation11] sm:$0xf]
        %v1005 = vld [vmem:[#allocation11 + $0x4] sm:$0xf]
        %v1006 = vld [vmem:[#allocation11 + $0x8] sm:$0xf]
        %v1007 = vld [vmem:[#allocation11 + $0xc] sm:$0xf]
        %v1008 = vld [vmem:[#allocation11 + $0x10] sm:$0xf]
        %v1009 = vld [vmem:[#allocation11 + $0x14] sm:$0xf]
        %v1010 = vld [vmem:[#allocation11 + $0x18] sm:$0xf]
        %v1011 = vld [vmem:[#allocation11 + $0x1c] sm:$0xf]
        %v1012 = vld [vmem:[#allocation11 + $0x20] sm:$0xf]
        %v1013 = vld [vmem:[#allocation11 + $0x24] sm:$0xf]
        %v1014 = vld [vmem:[#allocation11 + $0x28] sm:$0xf]
        %v1015 = vld [vmem:[#allocation11 + $0x2c] sm:$0xf]
        %v1016 = vld [vmem:[#allocation11 + $0x30] sm:$0xf]
        %v1017 = vld [vmem:[#allocation11 + $0x34] sm:$0xf]
        %v1018 = vld [vmem:[#allocation11 + $0x38] sm:$0xf]
        %v1019 = vld [vmem:[#allocation11 + $0x3c] sm:$0xf]
        %v1036 = vunpack.c.l.b16 %v1004
        %v1037 = vunpack.c.l.b16 %v1005
        %v1038 = vunpack.c.l.b16 %v1006
        %v1039 = vunpack.c.l.b16 %v1007
        %v1040 = vunpack.c.l.b16 %v1008
        %v1041 = vunpack.c.l.b16 %v1009
        %v1042 = vunpack.c.l.b16 %v1010
        %v1043 = vunpack.c.l.b16 %v1011
        %v1044 = vunpack.c.l.b16 %v1012
        %v1045 = vunpack.c.l.b16 %v1013
        %v1046 = vunpack.c.l.b16 %v1014
        %v1047 = vunpack.c.l.b16 %v1015
        %v1048 = vunpack.c.l.b16 %v1016
        %v1049 = vunpack.c.l.b16 %v1017
        %v1050 = vunpack.c.l.b16 %v1018
        %v1051 = vunpack.c.l.b16 %v1019
        %v1052 = vpack.c.b16 %v1037, %v1036
        %v1053 = vpack.c.b16 %v1039, %v1038
        %v1054 = vpack.c.b16 %v1041, %v1040
        %v1055 = vpack.c.b16 %v1043, %v1042
        %v1056 = vpack.c.b16 %v1045, %v1044
        %v1057 = vpack.c.b16 %v1047, %v1046
        %v1058 = vpack.c.b16 %v1049, %v1048
        %v1059 = vpack.c.b16 %v1051, %v1050
        %1068 = vmatprep.subr.bf16.mxu0 0
        %1069 = vmatpush1.bf16.msra.mxu0 %v1052
        %1070 = vmatprep.subr.bf16.mxu0 0
        %1071 = vmatpush1.bf16.msra.mxu0 %v1053
        %1072 = vmatprep.subr.bf16.mxu0 0
        %1073 = vmatpush1.bf16.msra.mxu0 %v1054
        %1074 = vmatprep.subr.bf16.mxu0 0
        %1075 = vmatpush1.bf16.msra.mxu0 %v1055
        %1076 = vmatprep.subr.bf16.mxu0 0
        %1077 = vmatpush1.bf16.msra.mxu0 %v1056
        %1078 = vmatprep.subr.bf16.mxu0 0
        %1079 = vmatpush1.bf16.msra.mxu0 %v1057
        %1080 = vmatprep.subr.bf16.mxu0 0
        %1081 = vmatpush1.bf16.msra.mxu0 %v1058
        %1082 = vmatprep.subr.bf16.mxu0 0
        %1083 = vmatpush1.bf16.msra.mxu0 %v1059
        %1084 = vmatprep.subr.bf16.mxu0 0
        %1085 = vmatpush1.bf16.msra.mxu0 0
        %1086 = vmatprep.subr.bf16.mxu0 0
        %1087 = vmatpush1.bf16.msra.mxu0 0
        %1088 = vmatprep.subr.bf16.mxu0 0
        %1089 = vmatpush1.bf16.msra.mxu0 0
        %1090 = vmatprep.subr.bf16.mxu0 0
        %1091 = vmatpush1.bf16.msra.mxu0 0
        %1092 = vmatprep.subr.bf16.mxu0 0
        %1093 = vmatpush1.bf16.msra.mxu0 0
        %1094 = vmatprep.subr.bf16.mxu0 0
        %1095 = vmatpush1.bf16.msra.mxu0 0
        %1096 = vmatprep.subr.bf16.mxu0 0
        %1097 = vmatpush1.bf16.msra.mxu0 0
        %1098 = vmatprep.subr.bf16.mxu0 0
        %1099 = vmatpush1.bf16.msra.mxu0 0
        %1100 = vmatprep.mubr.bf16.mxu0 0
        %1101 = vmatmul.mubr.bf16.gmra.mrb[0].mxu0 %v1003
        %v1102 = vpop.f32.mrb[0].mxu0
        %v1103 = vadd.f32 0.0, %v1102
        %v1104 = vpop.f32.mrb[0].mxu0
        %v1105 = vpop.f32.mrb[0].mxu0
        %v1106 = vpop.f32.mrb[0].mxu0
        %1107 = vdwg.mxu0
        %v1108 = vmax.f32 %v1103, 1e-08
        %v1109 = vlog2.pop %v1108
        %v1110 = vmul.f32 %v1109, 0.6931472
        %1111 = vst [vmem:[%s372] sm:$0xff] %v1110
        %s1112 = sand.u32 %s205, 1
        %s1113 = scalar_lea.sflag [#allocation5], %s1112
        %s1114 = sand.u32 %s205, 1
        %s1115 = smul.addr %s1114, 8
        %s1116 = scalar_lea.vmem [#allocation12], %s1115
        // Predicated region
        $region73: #{tpu_custom_call.1} parent=47 // pred_check
          %p1117 = pneg %p215
        $region74: #{tpu_custom_call.1} parent=47 // pred_check_branch
          %1119 = sbr.rel (%p1117) target = $region76
        $region75: #{tpu_custom_call.1} parent=47 // pred_region
          %s1121 = ssub.s32 128, 128
          %1122 = vsyncadd %s1113, %s1121
          %s1123 = sadd.s32 %s31, %s30
          %s1124 = smul.addr %s1123, 128
          %s1125 = scalar_lea.hbm %s7, %s1124
          %s1127 = sshll.u32 %s1116, 4
          %s1128 = int_to_ptr.vmem [resolvable:$true] %s1127
          %1130 = dma.vmem_to_hbm [thread:$0]  %s1128, 128, %s1125, %s1113
        $region76: #{tpu_custom_call.1} parent=47 // pred_fallthru
          _
      $region48: #{tpu_custom_call.1} parent=5 // pred_fallthru
        _
      %p1131 = scmp.le.s32.totalorder 2, %s21
      // Predicated region
      $region77: #{tpu_custom_call.1} parent=5 // pred_check
        %p1132 = pneg %p1131
      $region78: #{tpu_custom_call.1} parent=5 // pred_check_branch
        %1134 = sbr.rel (%p1132) target = $region80
      $region79: #{tpu_custom_call.1} parent=5 // pred_region
        %s1135 = ssub.s32 %s21, 2
        // Predicated region
        $region81: #{tpu_custom_call.1} parent=79 // pred_check
          %p1136 = pneg %p221
        $region82: #{tpu_custom_call.1} parent=79 // pred_check_branch
          %1138 = sbr.rel (%p1136) target = $region84
        $region83: #{tpu_custom_call.1} parent=79 // pred_region
          %s1139 = sand.u32 %s206, 1
          %s1140 = scalar_lea.sflag [#allocation5], %s1139
          %s1141 = sand.u32 %s206, 1
          %s1142 = smul.addr %s1141, 8
          %s1143 = scalar_lea.vmem [#allocation12], %s1142
          %1144 = dma.done %s1140, 128
        $region84: #{tpu_custom_call.1} parent=79 // pred_fallthru
          _
      $region80: #{tpu_custom_call.1} parent=5 // pred_fallthru
        _
    $region6: #{tpu_custom_call.1} parent=1 // loop_footer
      %s25 = sadd.s32 1, %s21
    $region7: #{tpu_custom_call.1} parent=1 // loop_footer_branch
      %20 = sbr.rel target = $region3
    $region8: #{tpu_custom_call.1} parent=1 // loop_exit
      _
    %1145 = vsyncpa [#allocation4], 1
    %s1146 = scalar_lea.sflag [#allocation4], 1
    %1147 = vsyncpa %s1146, 1
    %1148 = vsyncpa [#allocation7], 1
    %1149 = vsyncpa [#allocation10], 1
    %1150 = vsyncpa [#allocation5], 1
    %s1151 = scalar_lea.sflag [#allocation5], 1
    %1152 = vsyncpa %s1151, 1

// kernel: tpu_custom_call.1
$region0: #{tpu_custom_call.1}
  #allocation0 [shape = 'u32[]', space=smem, size = 0x4, offset = 0x4, fixed_abs, tag = 'smem constant byte address 0x4 - core index']
  #allocation1 [shape = 'u32[144,128]{1,0:T(1,128)}', space=vmem, size = 0x12000, scoped, tag = 'internal scratch']
  #allocation2 [shape = 'bf16[8,128]{1,0:T(8,128)(2,1)}', space=vmem, size = 0x800, scoped, tag = 'scratch operand']
  %s0 = inlined_call_operand.hbm [shape: bf16[16,128], index: 0, kind: input, shape index: {}]
  %s1 = inlined_call_operand.hbm [shape: bf16[128,128], index: 1, kind: input, shape index: {}]
  %s2 = inlined_call_operand.vmem [shape: f32[1,128], index: 2, kind: input, shape index: {}]
  %s3 = inlined_call_operand.hbm [shape: bf16[128,384], index: 3, kind: input, shape index: {}]
  %s4 = inlined_call_operand.hbm [shape: bf16[128,384], index: 4, kind: input, shape index: {}]
  %s5 = inlined_call_operand.vmem [shape: f32[1,128], index: 5, kind: input, shape index: {}]
  %s6 = inlined_call_operand.hbm [shape: bf16[128,128], index: 6, kind: input, shape index: {}]
  %s7 = inlined_call_operand.hbm [shape: f32[16,48], index: 7, kind: output, shape index: {}]
  %s8 = sld [smem:[#allocation0]]
  $region85: #{tpu_custom_call.1} parent=0
    _
  %s10 = ssub.s32 1, %s8
  %s11 = scalar_select 0, %s10, %s8
  $region1: #{tpu_custom_call.1} parent=0
    #allocation3 [shape = 'u8[4096]{0}', space=vmem, size = 0x1000, scoped, tag = 'input window, operand 0']
    #allocation4 [shape = 's32[2]{0}', space=sflag, size = 0x8, scoped, tag = 'scoped memory for tpu_custom_call.1']
    #allocation5 [shape = 's32[2]{0}', space=sflag, size = 0x8, scoped, tag = 'scoped memory for tpu_custom_call.1']
    #allocation6 [shape = 'u8[32768]{0}', space=vmem, size = 0x8000, scoped, tag = 'input window, operand 1, single buffered']
    #allocation7 [shape = 's32[1]{0}', space=sflag, size = 0x4, scoped, tag = 'scoped memory for tpu_custom_call.1']
    #allocation8 [shape = 'u8[98304]{0}', space=vmem, size = 0x18000, scoped, tag = 'input window, operand 3, single buffered']
    #allocation9 [shape = 'u8[98304]{0}', space=vmem, size = 0x18000, scoped, tag = 'input window, operand 4, single buffered']
    #allocation10 [shape = 's32[1]{0}', space=sflag, size = 0x4, scoped, tag = 'scoped memory for tpu_custom_call.1']
    #allocation11 [shape = 'u8[32768]{0}', space=vmem, size = 0x8000, scoped, tag = 'input window, operand 6, single buffered']
    #allocation12 [shape = 'u8[8192]{0}', space=vmem, size = 0x2000, scoped, tag = 'output window, operand 0']
    %12 = vsyncpa [#allocation4], 0
    %s13 = scalar_lea.sflag [#allocation4], 1
    %14 = vsyncpa %s13, 0
    %15 = vsyncpa [#allocation7], 0
    %16 = vsyncpa [#allocation10], 0
    %17 = vsyncpa [#allocation5], 0
    %s18 = scalar_lea.sflag [#allocation5], 1
    %19 = vsyncpa %s18, 0
    loop: start=0, step=1, limit=4
    $region2: #{tpu_custom_call.1} parent=1 // loop_pre_header
      _
    $region3: #{tpu_custom_call.1} parent=1 // loop_header
      %s21 = sphi 0, %s25
      %p22 = scmp.ge.s32.totalorder %s21, 4
      %s28 = sphi 0, %s40
      %s29 = sphi 0, %s36
      %s30 = sphi 0, %s28
      %s31 = sphi 0, %s29
      %s32 = sphi 0, %s30
      %s33 = sphi 0, %s31
      %s43 = sphi 0, %s45
      %s46 = sphi 0, %s43
      %s47 = sphi 0, %s46
      %s63 = sphi 0, %s47
      %s67 = sphi 0, %s67
      %s69 = sphi 0, %s67
      %s70 = sphi 0, %s69
      %s84 = sphi 0, %s70
      %s88 = sphi 0, %s88
      %s90 = sphi 0, %s88
      %s91 = sphi 0, %s90
      %s105 = sphi 0, %s91
      %s109 = sphi 0, %s109
      %s111 = sphi 0, %s109
      %s112 = sphi 0, %s111
      %s126 = sphi 0, %s112
      %s130 = sphi 0, %s130
      %s132 = sphi 0, %s130
      %s133 = sphi 0, %s132
      %s147 = sphi 0, %s133
      %s151 = sphi 0, %s151
      %s153 = sphi 0, %s151
      %s154 = sphi 0, %s153
      %s168 = sphi 0, %s154
      %s174 = sphi 0, %s176
      %s177 = sphi 0, %s174
      %s178 = sphi 0, %s177
      %s194 = sphi 0, %s178
      %s202 = sphi 0, %s204
      %s205 = sphi 0, %s202
      %s206 = sphi 0, %s205
      %s222 = sphi 0, %s206
    $region4: #{tpu_custom_call.1} parent=1 // loop_header_branch
      %24 = sbr.rel (%p22) target = $region8
    $region5: #{tpu_custom_call.1} parent=1 // loop_body
      %s26 = ssub.s32 %s21, 1
      %s27 = ssub.s32 %s21, 2
      %s34 = sadd.s32 1, %s29
      %p35 = scmp.ge.s32.totalorder %s34, 1
      %s36 = scalar_select %p35, 0, %s34
      %s37 = sadd.s32 1, %s28
      %s38 = scalar_select %p35, %s37, %s28
      %p39 = scmp.ge.s32.totalorder %s38, 2
      %s40 = scalar_select %p39, 0, %s38
      %s41 = ssub.s32 %s28, %s40
      %p42 = scmp.eq.s32.totalorder %s41, 0
      %s44 = sadd.s32 %s43, 1
      %s45 = scalar_select %p42, %s43, %s44
      %p48 = pneg %p42
      %p49 = scmp.eq.s32.totalorder %s21, 1
      %p50 = por %p48, %p49
      %p51 = scmp.ne.s32.totalorder %s43, %s46
      %p52 = scmp.eq.s32.totalorder %s21, 0
      %p53 = por %p51, %p52
      %p54 = scmp.ne.s32.totalorder %s43, %s46
      %p55 = scmp.eq.s32.totalorder %s26, 1
      %p56 = por %p54, %p55
      %p57 = scmp.ne.s32.totalorder %s46, %s47
      %p58 = scmp.eq.s32.totalorder %s26, 0
      %p59 = por %p57, %p58
      %p60 = scmp.ne.s32.totalorder %s46, %s47
      %p61 = scmp.eq.s32.totalorder %s27, 1
      %p62 = por %p60, %p61
      %p64 = scmp.ne.s32.totalorder %s47, %s63
      %p65 = scmp.eq.s32.totalorder %s27, 0
      %p66 = por %p64, %p65
      %s68 = sadd.s32 %s67, 1
      %p71 = scmp.eq.s32.totalorder %s21, 1
      %p72 = scmp.ne.s32.totalorder %s67, %s69
      %p73 = scmp.eq.s32.totalorder %s21, 0
      %p74 = por %p72, %p73
      %p75 = scmp.ne.s32.totalorder %s67, %s69
      %p76 = scmp.eq.s32.totalorder %s26, 1
      %p77 = por %p75, %p76
      %p78 = scmp.ne.s32.totalorder %s69, %s70
      %p79 = scmp.eq.s32.totalorder %s26, 0
      %p80 = por %p78, %p79
      %p81 = scmp.ne.s32.totalorder %s69, %s70
      %p82 = scmp.eq.s32.totalorder %s27, 1
      %p83 = por %p81, %p82
      %p85 = scmp.ne.s32.totalorder %s70, %s84
      %p86 = scmp.eq.s32.totalorder %s27, 0
      %p87 = por %p85, %p86
      %s89 = sadd.s32 %s88, 1
      %p92 = scmp.eq.s32.totalorder %s21, 1
      %p93 = scmp.ne.s32.totalorder %s88, %s90
      %p94 = scmp.eq.s32.totalorder %s21, 0
      %p95 = por %p93, %p94
      %p96 = scmp.ne.s32.totalorder %s88, %s90
      %p97 = scmp.eq.s32.totalorder %s26, 1
      %p98 = por %p96, %p97
      %p99 = scmp.ne.s32.totalorder %s90, %s91
      %p100 = scmp.eq.s32.totalorder %s26, 0
      %p101 = por %p99, %p100
      %p102 = scmp.ne.s32.totalorder %s90, %s91
      %p103 = scmp.eq.s32.totalorder %s27, 1
      %p104 = por %p102, %p103
      %p106 = scmp.ne.s32.totalorder %s91, %s105
      %p107 = scmp.eq.s32.totalorder %s27, 0
      %p108 = por %p106, %p107
      %s110 = sadd.s32 %s109, 1
      %p113 = scmp.eq.s32.totalorder %s21, 1
      %p114 = scmp.ne.s32.totalorder %s109, %s111
      %p115 = scmp.eq.s32.totalorder %s21, 0
      %p116 = por %p114, %p115
      %p117 = scmp.ne.s32.totalorder %s109, %s111
      %p118 = scmp.eq.s32.totalorder %s26, 1
      %p119 = por %p117, %p118
      %p120 = scmp.ne.s32.totalorder %s111, %s112
      %p121 = scmp.eq.s32.totalorder %s26, 0
      %p122 = por %p120, %p121
      %p123 = scmp.ne.s32.totalorder %s111, %s112
      %p124 = scmp.eq.s32.totalorder %s27, 1
      %p125 = por %p123, %p124
      %p127 = scmp.ne.s32.totalorder %s112, %s126
      %p128 = scmp.eq.s32.totalorder %s27, 0
      %p129 = por %p127, %p128
      %s131 = sadd.s32 %s130, 1
      %p134 = scmp.eq.s32.totalorder %s21, 1
      %p135 = scmp.ne.s32.totalorder %s130, %s132
      %p136 = scmp.eq.s32.totalorder %s21, 0
      %p137 = por %p135, %p136
      %p138 = scmp.ne.s32.totalorder %s130, %s132
      %p139 = scmp.eq.s32.totalorder %s26, 1
      %p140 = por %p138, %p139
      %p141 = scmp.ne.s32.totalorder %s132, %s133
      %p142 = scmp.eq.s32.totalorder %s26, 0
      %p143 = por %p141, %p142
      %p144 = scmp.ne.s32.totalorder %s132, %s133
      %p145 = scmp.eq.s32.totalorder %s27, 1
      %p146 = por %p144, %p145
      %p148 = scmp.ne.s32.totalorder %s133, %s147
      %p149 = scmp.eq.s32.totalorder %s27, 0
      %p150 = por %p148, %p149
      %s152 = sadd.s32 %s151, 1
      %p155 = scmp.eq.s32.totalorder %s21, 1
      %p156 = scmp.ne.s32.totalorder %s151, %s153
      %p157 = scmp.eq.s32.totalorder %s21, 0
      %p158 = por %p156, %p157
      %p159 = scmp.ne.s32.totalorder %s151, %s153
      %p160 = scmp.eq.s32.totalorder %s26, 1
      %p161 = por %p159, %p160
      %p162 = scmp.ne.s32.totalorder %s153, %s154
      %p163 = scmp.eq.s32.totalorder %s26, 0
      %p164 = por %p162, %p163
      %p165 = scmp.ne.s32.totalorder %s153, %s154
      %p166 = scmp.eq.s32.totalorder %s27, 1
      %p167 = por %p165, %p166
      %p169 = scmp.ne.s32.totalorder %s154, %s168
      %p170 = scmp.eq.s32.totalorder %s27, 0
      %p171 = por %p169, %p170
      %s172 = ssub.s32 %s29, %s36
      %p173 = scmp.eq.s32.totalorder %s172, 0
      %s175 = sadd.s32 %s174, 1
      %s176 = scalar_select %p173, %s174, %s175
      %p179 = pneg %p173
      %p180 = scmp.eq.s32.totalorder %s21, 1
      %p181 = por %p179, %p180
      %p182 = scmp.ne.s32.totalorder %s174, %s177
      %p183 = scmp.eq.s32.totalorder %s21, 0
      %p184 = por %p182, %p183
      %p185 = scmp.ne.s32.totalorder %s174, %s177
      %p186 = scmp.eq.s32.totalorder %s26, 1
      %p187 = por %p185, %p186
      %p188 = scmp.ne.s32.totalorder %s177, %s178
      %p189 = scmp.eq.s32.totalorder %s26, 0
      %p190 = por %p188, %p189
      %p191 = scmp.ne.s32.totalorder %s177, %s178
      %p192 = scmp.eq.s32.totalorder %s27, 1
      %p193 = por %p191, %p192
      %p195 = scmp.ne.s32.totalorder %s178, %s194
      %p196 = scmp.eq.s32.totalorder %s27, 0
      %p197 = por %p195, %p196
      %s198 = ssub.s32 %s28, %s40
      %s199 = ssub.s32 %s29, %s36
      %s200 = sor.u32 %s198, %s199
      %p201 = scmp.eq.s32.totalorder %s200, 0
      %s203 = sadd.s32 %s202, 1
      %s204 = scalar_select %p201, %s202, %s203
      %p207 = pneg %p201
      %p208 = scmp.eq.s32.totalorder %s21, 1
      %p209 = por %p207, %p208
      %p210 = scmp.ne.s32.totalorder %s202, %s205
      %p211 = scmp.eq.s32.totalorder %s21, 0
      %p212 = por %p210, %p211
      %p213 = scmp.ne.s32.totalorder %s202, %s205
      %p214 = scmp.eq.s32.totalorder %s26, 1
      %p215 = por %p213, %p214
      %p216 = scmp.ne.s32.totalorder %s205, %s206
      %p217 = scmp.eq.s32.totalorder %s26, 0
      %p218 = por %p216, %p217
      %p219 = scmp.ne.s32.totalorder %s205, %s206
      %p220 = scmp.eq.s32.totalorder %s27, 1
      %p221 = por %p219, %p220
      %p223 = scmp.ne.s32.totalorder %s206, %s222
      %p224 = scmp.eq.s32.totalorder %s27, 0
      %p225 = por %p223, %p224
      %p226 = scmp.le.s32.totalorder 1, %s21
      %p227 = scmp.lt.s32.totalorder %s21, 3
      %p228 = pnand %p226, %p227
      %p229 = pneg %p228
      // Predicated region
      $region9: #{tpu_custom_call.1} parent=5 // pred_check
        _
      $region10: #{tpu_custom_call.1} parent=5 // pred_check_branch
        %231 = sbr.rel (%p228) target = $region12
      $region11: #{tpu_custom_call.1} parent=5 // pred_region
        %s232 = ssub.s32 %s21, 1
        // Predicated region
        $region13: #{tpu_custom_call.1} parent=11 // pred_check
          %p233 = pneg %p80
        $region14: #{tpu_custom_call.1} parent=11 // pred_check_branch
          %235 = sbr.rel (%p233) target = $region16
        $region15: #{tpu_custom_call.1} parent=11 // pred_region
          %s237 = ssub.s32 1024, 1024
          %238 = vsyncadd [#allocation7], %s237
          %s239 = sshll.u32 [#allocation6], 4
          %s240 = int_to_ptr.vmem [resolvable:$true] %s239
          %245 = dma.hbm_to_vmem [thread:$0]  %s1, 1024, %s240, [#allocation7], 64, 64, 4
        $region16: #{tpu_custom_call.1} parent=11 // pred_fallthru
          _
        // Predicated region
        $region17: #{tpu_custom_call.1} parent=11 // pred_check
          %p246 = pneg %p101
        $region18: #{tpu_custom_call.1} parent=11 // pred_check_branch
          %248 = sbr.rel (%p246) target = $region20
        $region19: #{tpu_custom_call.1} parent=11 // pred_region
          _
        $region20: #{tpu_custom_call.1} parent=11 // pred_fallthru
          _
        // Predicated region
        $region21: #{tpu_custom_call.1} parent=11 // pred_check
          %p249 = pneg %p122
        $region22: #{tpu_custom_call.1} parent=11 // pred_check_branch
          %251 = sbr.rel (%p249) target = $region24
        $region23: #{tpu_custom_call.1} parent=11 // pred_region
          %s253 = ssub.s32 3072, 3072
          %254 = vsyncadd [#allocation7], %s253
          %s255 = sshll.u32 [#allocation8], 4
          %s256 = int_to_ptr.vmem [resolvable:$true] %s255
          %261 = dma.hbm_to_vmem [thread:$0]  %s3, 3072, %s256, [#allocation7], 192, 192, 12
        $region24: #{tpu_custom_call.1} parent=11 // pred_fallthru
          _
        // Predicated region
        $region25: #{tpu_custom_call.1} parent=11 // pred_check
          %p262 = pneg %p143
        $region26: #{tpu_custom_call.1} parent=11 // pred_check_branch
          %264 = sbr.rel (%p262) target = $region28
        $region27: #{tpu_custom_call.1} parent=11 // pred_region
          %s266 = ssub.s32 3072, 3072
          %267 = vsyncadd [#allocation10], %s266
          %s268 = sshll.u32 [#allocation9], 4
          %s269 = int_to_ptr.vmem [resolvable:$true] %s268
          %274 = dma.hbm_to_vmem [thread:$0]  %s4, 3072, %s269, [#allocation10], 192, 192, 12
        $region28: #{tpu_custom_call.1} parent=11 // pred_fallthru
          _
        // Predicated region
        $region29: #{tpu_custom_call.1} parent=11 // pred_check
          %p275 = pneg %p164
        $region30: #{tpu_custom_call.1} parent=11 // pred_check_branch
          %277 = sbr.rel (%p275) target = $region32
        $region31: #{tpu_custom_call.1} parent=11 // pred_region
          _
        $region32: #{tpu_custom_call.1} parent=11 // pred_fallthru
          _
        // Predicated region
        $region33: #{tpu_custom_call.1} parent=11 // pred_check
          %p278 = pneg %p190
        $region34: #{tpu_custom_call.1} parent=11 // pred_check_branch
          %280 = sbr.rel (%p278) target = $region36
        $region35: #{tpu_custom_call.1} parent=11 // pred_region
          %s282 = ssub.s32 1024, 1024
          %283 = vsyncadd [#allocation10], %s282
          %s284 = smul.addr %s31, 64
          %s285 = scalar_lea.hbm %s6, %s284
          %s286 = sshll.u32 [#allocation11], 4
          %s287 = int_to_ptr.vmem [resolvable:$true] %s286
          %292 = dma.hbm_to_vmem [thread:$0]  %s285, 1024, %s287, [#allocation10], 64, 64, 4
        $region36: #{tpu_custom_call.1} parent=11 // pred_fallthru
          _
      $region12: #{tpu_custom_call.1} parent=5 // pred_fallthru
        _
      %p293 = scmp.lt.s32.totalorder %s21, 2
      // Predicated region
      $region37: #{tpu_custom_call.1} parent=5 // pred_check
        %p294 = pneg %p293
      $region38: #{tpu_custom_call.1} parent=5 // pred_check_branch
        %296 = sbr.rel (%p294) target = $region40
      $region39: #{tpu_custom_call.1} parent=5 // pred_region
        // Predicated region
        $region41: #{tpu_custom_call.1} parent=39 // pred_check
          %p297 = pneg %p53
        $region42: #{tpu_custom_call.1} parent=39 // pred_check_branch
          %299 = sbr.rel (%p297) target = $region44
        $region43: #{tpu_custom_call.1} parent=39 // pred_region
          %s300 = sand.u32 %s43, 1
          %s301 = scalar_lea.sflag [#allocation4], %s300
          %s302 = sand.u32 %s43, 1
          %s303 = smul.addr %s302, 4
          %s304 = scalar_lea.vmem [#allocation3], %s303
          %s306 = ssub.s32 64, 64
          %307 = vsyncadd %s301, %s306
          %s308 = smul.addr %s28, 64
          %s309 = scalar_lea.hbm %s0, %s308
          %s311 = sshll.u32 %s304, 4
          %s312 = int_to_ptr.vmem [resolvable:$true] %s311
          %314 = dma.hbm_to_vmem [thread:$0]  %s309, 64, %s312, %s301
        $region44: #{tpu_custom_call.1} parent=39 // pred_fallthru
          _
      $region40: #{tpu_custom_call.1} parent=5 // pred_fallthru
        _
      %p315 = scmp.le.s32.totalorder 1, %s21
      %p316 = scmp.lt.s32.totalorder %s21, 3
      %p317 = pnand %p315, %p316
      %p318 = pneg %p317
      // Predicated region
      $region45: #{tpu_custom_call.1} parent=5 // pred_check
        _
      $region46: #{tpu_custom_call.1} parent=5 // pred_check_branch
        %320 = sbr.rel (%p317) target = $region48
      $region47: #{tpu_custom_call.1} parent=5 // pred_region
        %s321 = ssub.s32 %s21, 1
        %s322 = sand.u32 %s46, 1
        %s323 = scalar_lea.sflag [#allocation4], %s322
        %s324 = sand.u32 %s46, 1
        %s325 = smul.addr %s324, 4
        %s326 = scalar_lea.vmem [#allocation3], %s325
        // Predicated region
        $region49: #{tpu_custom_call.1} parent=47 // pred_check
          %p327 = pneg %p59
        $region50: #{tpu_custom_call.1} parent=47 // pred_check_branch
          %329 = sbr.rel (%p327) target = $region52
        $region51: #{tpu_custom_call.1} parent=47 // pred_region
          %330 = dma.done %s323, 64
        $region52: #{tpu_custom_call.1} parent=47 // pred_fallthru
          _
        // Predicated region
        $region53: #{tpu_custom_call.1} parent=47 // pred_check
          %p331 = pneg %p80
        $region54: #{tpu_custom_call.1} parent=47 // pred_check_branch
          %333 = sbr.rel (%p331) target = $region56
        $region55: #{tpu_custom_call.1} parent=47 // pred_region
          %334 = dma.done [#allocation7], 1024
        $region56: #{tpu_custom_call.1} parent=47 // pred_fallthru
          _
        // Predicated region
        $region57: #{tpu_custom_call.1} parent=47 // pred_check
          %p335 = pneg %p122
        $region58: #{tpu_custom_call.1} parent=47 // pred_check_branch
          %337 = sbr.rel (%p335) target = $region60
        $region59: #{tpu_custom_call.1} parent=47 // pred_region
          %338 = dma.done [#allocation7], 3072
        $region60: #{tpu_custom_call.1} parent=47 // pred_fallthru
          _
        // Predicated region
        $region61: #{tpu_custom_call.1} parent=47 // pred_check
          %p339 = pneg %p143
        $region62: #{tpu_custom_call.1} parent=47 // pred_check_branch
          %341 = sbr.rel (%p339) target = $region64
        $region63: #{tpu_custom_call.1} parent=47 // pred_region
          %342 = dma.done [#allocation10], 3072
        $region64: #{tpu_custom_call.1} parent=47 // pred_fallthru
          _
        // Predicated region
        $region65: #{tpu_custom_call.1} parent=47 // pred_check
          %p343 = pneg %p190
        $region66: #{tpu_custom_call.1} parent=47 // pred_check_branch
          %345 = sbr.rel (%p343) target = $region68
        $region67: #{tpu_custom_call.1} parent=47 // pred_region
          %346 = dma.done [#allocation10], 1024
        $region68: #{tpu_custom_call.1} parent=47 // pred_fallthru
          _
        %s347 = sand.u32 %s46, 1
        %s348 = scalar_lea.sflag [#allocation4], %s347
        %s349 = sand.u32 %s46, 1
        %s350 = smul.addr %s349, 4
        %s351 = scalar_lea.vmem [#allocation3], %s350
        %p352 = pneg %p59
        %p353 = pneg %p56
        %p354 = pneg %p80
        %p355 = pneg %p77
        %p356 = pneg %p101
        %p357 = pneg %p98
        %p358 = pneg %p122
        %p359 = pneg %p119
        %p360 = pneg %p143
        %p361 = pneg %p140
        %p362 = pneg %p164
        %p363 = pneg %p161
        %p364 = pneg %p190
        %p365 = pneg %p187
        %p366 = pneg %p218
        %p367 = pneg %p215
        %s368 = sand.u32 %s205, 1
        %s369 = scalar_lea.sflag [#allocation5], %s368
        %s370 = sand.u32 %s205, 1
        %s371 = smul.addr %s370, 8
        %s372 = scalar_lea.vmem [#allocation12], %s371
        %p374 = scmp.eq.s32.totalorder %s31, 0
        // Predicated region
        $region69: #{tpu_custom_call.1} parent=47 // pred_check
          %p375 = pneg %p374
        $region70: #{tpu_custom_call.1} parent=47 // pred_check_branch
          %377 = sbr.rel (%p375) target = $region72
        $region71: #{tpu_custom_call.1} parent=47 // pred_region
          %v378 = vld [vmem:[%s326] sm:$0xf]
          %v379 = vld [vmem:[#allocation6] sm:$0xf]
          %v380 = vld [vmem:[#allocation6 + $0x4] sm:$0xf]
          %v381 = vld [vmem:[#allocation6 + $0x8] sm:$0xf]
          %v382 = vld [vmem:[#allocation6 + $0xc] sm:$0xf]
          %v383 = vld [vmem:[#allocation6 + $0x10] sm:$0xf]
          %v384 = vld [vmem:[#allocation6 + $0x14] sm:$0xf]
          %v385 = vld [vmem:[#allocation6 + $0x18] sm:$0xf]
          %v386 = vld [vmem:[#allocation6 + $0x1c] sm:$0xf]
          %v387 = vld [vmem:[#allocation6 + $0x20] sm:$0xf]
          %v388 = vld [vmem:[#allocation6 + $0x24] sm:$0xf]
          %v389 = vld [vmem:[#allocation6 + $0x28] sm:$0xf]
          %v390 = vld [vmem:[#allocation6 + $0x2c] sm:$0xf]
          %v391 = vld [vmem:[#allocation6 + $0x30] sm:$0xf]
          %v392 = vld [vmem:[#allocation6 + $0x34] sm:$0xf]
          %v393 = vld [vmem:[#allocation6 + $0x38] sm:$0xf]
          %v394 = vld [vmem:[#allocation6 + $0x3c] sm:$0xf]
          %v395 = vld [vmem:[%s2] sm:$0x1]
          %v397 = vlaneseq
          %v398 = vshrl.u32 %v397, 7
          %v399 = vsub.s32 0, %v398
          %v400 = vrot.slane %v395, %v399
          %v418 = vunpack.c.l.b16 %v379
          %v419 = vunpack.c.l.b16 %v380
          %v420 = vunpack.c.l.b16 %v381
          %v421 = vunpack.c.l.b16 %v382
          %v422 = vunpack.c.l.b16 %v383
          %v423 = vunpack.c.l.b16 %v384
          %v424 = vunpack.c.l.b16 %v385
          %v425 = vunpack.c.l.b16 %v386
          %v426 = vunpack.c.l.b16 %v387
          %v427 = vunpack.c.l.b16 %v388
          %v428 = vunpack.c.l.b16 %v389
          %v429 = vunpack.c.l.b16 %v390
          %v430 = vunpack.c.l.b16 %v391
          %v431 = vunpack.c.l.b16 %v392
          %v432 = vunpack.c.l.b16 %v393
          %v433 = vunpack.c.l.b16 %v394
          %v434 = vpack.c.b16 %v419, %v418
          %v435 = vpack.c.b16 %v421, %v420
          %v436 = vpack.c.b16 %v423, %v422
          %v437 = vpack.c.b16 %v425, %v424
          %v438 = vpack.c.b16 %v427, %v426
          %v439 = vpack.c.b16 %v429, %v428
          %v440 = vpack.c.b16 %v431, %v430
          %v441 = vpack.c.b16 %v433, %v432
          %450 = vmatprep.subr.bf16.mxu0 0
          %451 = vmatpush1.bf16.msra.mxu0 %v434
          %452 = vmatprep.subr.bf16.mxu0 0
          %453 = vmatpush1.bf16.msra.mxu0 %v435
          %454 = vmatprep.subr.bf16.mxu0 0
          %455 = vmatpush1.bf16.msra.mxu0 %v436
          %456 = vmatprep.subr.bf16.mxu0 0
          %457 = vmatpush1.bf16.msra.mxu0 %v437
          %458 = vmatprep.subr.bf16.mxu0 0
          %459 = vmatpush1.bf16.msra.mxu0 %v438
          %460 = vmatprep.subr.bf16.mxu0 0
          %461 = vmatpush1.bf16.msra.mxu0 %v439
          %462 = vmatprep.subr.bf16.mxu0 0
          %463 = vmatpush1.bf16.msra.mxu0 %v440
          %464 = vmatprep.subr.bf16.mxu0 0
          %465 = vmatpush1.bf16.msra.mxu0 %v441
          %466 = vmatprep.subr.bf16.mxu0 0
          %467 = vmatpush1.bf16.msra.mxu0 0
          %468 = vmatprep.subr.bf16.mxu0 0
          %469 = vmatpush1.bf16.msra.mxu0 0
          %470 = vmatprep.subr.bf16.mxu0 0
          %471 = vmatpush1.bf16.msra.mxu0 0
          %472 = vmatprep.subr.bf16.mxu0 0
          %473 = vmatpush1.bf16.msra.mxu0 0
          %474 = vmatprep.subr.bf16.mxu0 0
          %475 = vmatpush1.bf16.msra.mxu0 0
          %476 = vmatprep.subr.bf16.mxu0 0
          %477 = vmatpush1.bf16.msra.mxu0 0
          %478 = vmatprep.subr.bf16.mxu0 0
          %479 = vmatpush1.bf16.msra.mxu0 0
          %480 = vmatprep.subr.bf16.mxu0 0
          %481 = vmatpush1.bf16.msra.mxu0 0
          %482 = vmatprep.mubr.bf16.mxu0 0
          %483 = vmatmul.mubr.bf16.gmra.mrb[0].mxu0 %v378
          %v484 = vpop.f32.mrb[0].mxu0
          %v485 = vadd.f32 %v400, %v484
          %v486 = vpop.f32.mrb[0].mxu0
          %v487 = vpop.f32.mrb[0].mxu0
          %v488 = vpop.f32.mrb[0].mxu0
          %489 = vdwg.mxu0
          %v490 = vxor.u32 %v485, 2147483648
          %v491 = vmul.f32 %v490, 1.442695
          %v492 = vpow.pop %v491
          %v493 = vadd.f32 %v492, 1.0
          %v494 = vrcp.pop %v493
          %v495 = vmul.f32 1.0, %v494
          %v496 = vld [vmem:[#allocation8] sm:$0xff]
          %v497 = vld [vmem:[#allocation8 + $0x8] sm:$0xf]
          %v498 = vld [vmem:[#allocation8 + $0xc] sm:$0xff]
          %v499 = vld [vmem:[#allocation8 + $0x14] sm:$0xf]
          %v500 = vld [vmem:[#allocation8 + $0x18] sm:$0xff]
          %v501 = vld [vmem:[#allocation8 + $0x20] sm:$0xf]
          %v502 = vld [vmem:[#allocation8 + $0x24] sm:$0xff]
          %v503 = vld [vmem:[#allocation8 + $0x2c] sm:$0xf]
          %v504 = vld [vmem:[#allocation8 + $0x30] sm:$0xff]
          %v505 = vld [vmem:[#allocation8 + $0x38] sm:$0xf]
          %v506 = vld [vmem:[#allocation8 + $0x3c] sm:$0xff]
          %v507 = vld [vmem:[#allocation8 + $0x44] sm:$0xf]
          %v508 = vld [vmem:[#allocation8 + $0x48] sm:$0xff]
          %v509 = vld [vmem:[#allocation8 + $0x50] sm:$0xf]
          %v510 = vld [vmem:[#allocation8 + $0x54] sm:$0xff]
          %v511 = vld [vmem:[#allocation8 + $0x5c] sm:$0xf]
          %v512 = vld [vmem:[#allocation8 + $0x60] sm:$0xff]
          %v513 = vld [vmem:[#allocation8 + $0x68] sm:$0xf]
          %v514 = vld [vmem:[#allocation8 + $0x6c] sm:$0xff]
          %v515 = vld [vmem:[#allocation8 + $0x74] sm:$0xf]
          %v516 = vld [vmem:[#allocation8 + $0x78] sm:$0xff]
          %v517 = vld [vmem:[#allocation8 + $0x80] sm:$0xf]
          %v518 = vld [vmem:[#allocation8 + $0x84] sm:$0xff]
          %v519 = vld [vmem:[#allocation8 + $0x8c] sm:$0xf]
          %v520 = vld [vmem:[#allocation8 + $0x90] sm:$0xff]
          %v521 = vld [vmem:[#allocation8 + $0x98] sm:$0xf]
          %v522 = vld [vmem:[#allocation8 + $0x9c] sm:$0xff]
          %v523 = vld [vmem:[#allocation8 + $0xa4] sm:$0xf]
          %v524 = vld [vmem:[#allocation8 + $0xa8] sm:$0xff]
          %v525 = vld [vmem:[#allocation8 + $0xb0] sm:$0xf]
          %v526 = vld [vmem:[#allocation8 + $0xb4] sm:$0xff]
          %v527 = vld [vmem:[#allocation8 + $0xbc] sm:$0xf]
          %v560 = vunpack.c.l.b16 %v496
          %v561 = vunpack.c.h.b16 %v496
          %v562 = vunpack.c.l.b16 %v497
          %v563 = vunpack.c.l.b16 %v498
          %v564 = vunpack.c.h.b16 %v498
          %v565 = vunpack.c.l.b16 %v499
          %v566 = vunpack.c.l.b16 %v500
          %v567 = vunpack.c.h.b16 %v500
          %v568 = vunpack.c.l.b16 %v501
          %v569 = vunpack.c.l.b16 %v502
          %v570 = vunpack.c.h.b16 %v502
          %v571 = vunpack.c.l.b16 %v503
          %v572 = vunpack.c.l.b16 %v504
          %v573 = vunpack.c.h.b16 %v504
          %v574 = vunpack.c.l.b16 %v505
          %v575 = vunpack.c.l.b16 %v506
          %v576 = vunpack.c.h.b16 %v506
          %v577 = vunpack.c.l.b16 %v507
          %v578 = vunpack.c.l.b16 %v508
          %v579 = vunpack.c.h.b16 %v508
          %v580 = vunpack.c.l.b16 %v509
          %v581 = vunpack.c.l.b16 %v510
          %v582 = vunpack.c.h.b16 %v510
          %v583 = vunpack.c.l.b16 %v511
          %v584 = vunpack.c.l.b16 %v512
          %v585 = vunpack.c.h.b16 %v512
          %v586 = vunpack.c.l.b16 %v513
          %v587 = vunpack.c.l.b16 %v514
          %v588 = vunpack.c.h.b16 %v514
          %v589 = vunpack.c.l.b16 %v515
          %v590 = vunpack.c.l.b16 %v516
          %v591 = vunpack.c.h.b16 %v516
          %v592 = vunpack.c.l.b16 %v517
          %v593 = vunpack.c.l.b16 %v518
          %v594 = vunpack.c.h.b16 %v518
          %v595 = vunpack.c.l.b16 %v519
          %v596 = vunpack.c.l.b16 %v520
          %v597 = vunpack.c.h.b16 %v520
          %v598 = vunpack.c.l.b16 %v521
          %v599 = vunpack.c.l.b16 %v522
          %v600 = vunpack.c.h.b16 %v522
          %v601 = vunpack.c.l.b16 %v523
          %v602 = vunpack.c.l.b16 %v524
          %v603 = vunpack.c.h.b16 %v524
          %v604 = vunpack.c.l.b16 %v525
          %v605 = vunpack.c.l.b16 %v526
          %v606 = vunpack.c.h.b16 %v526
          %v607 = vunpack.c.l.b16 %v527
          %v608 = vpack.c.b16 %v563, %v560
          %v609 = vpack.c.b16 %v564, %v561
          %v610 = vpack.c.b16 %v565, %v562
          %v611 = vpack.c.b16 %v569, %v566
          %v612 = vpack.c.b16 %v570, %v567
          %v613 = vpack.c.b16 %v571, %v568
          %v614 = vpack.c.b16 %v575, %v572
          %v615 = vpack.c.b16 %v576, %v573
          %v616 = vpack.c.b16 %v577, %v574
          %v617 = vpack.c.b16 %v581, %v578
          %v618 = vpack.c.b16 %v582, %v579
          %v619 = vpack.c.b16 %v583, %v580
          %v620 = vpack.c.b16 %v587, %v584
          %v621 = vpack.c.b16 %v588, %v585
          %v622 = vpack.c.b16 %v589, %v586
          %v623 = vpack.c.b16 %v593, %v590
          %v624 = vpack.c.b16 %v594, %v591
          %v625 = vpack.c.b16 %v595, %v592
          %v626 = vpack.c.b16 %v599, %v596
          %v627 = vpack.c.b16 %v600, %v597
          %v628 = vpack.c.b16 %v601, %v598
          %v629 = vpack.c.b16 %v605, %v602
          %v630 = vpack.c.b16 %v606, %v603
          %v631 = vpack.c.b16 %v607, %v604
          %656 = vmatprep.subr.bf16.mxu0 %v609
          %657 = vmatpush1.bf16.msra.mxu0 %v608
          %658 = vmatprep.subr.bf16.mxu0 %v612
          %659 = vmatpush1.bf16.msra.mxu0 %v611
          %660 = vmatprep.subr.bf16.mxu0 %v615
          %661 = vmatpush1.bf16.msra.mxu0 %v614
          %662 = vmatprep.subr.bf16.mxu0 %v618
          %663 = vmatpush1.bf16.msra.mxu0 %v617
          %664 = vmatprep.subr.bf16.mxu0 %v621
          %665 = vmatpush1.bf16.msra.mxu0 %v620
          %666 = vmatprep.subr.bf16.mxu0 %v624
          %667 = vmatpush1.bf16.msra.mxu0 %v623
          %668 = vmatprep.subr.bf16.mxu0 %v627
          %669 = vmatpush1.bf16.msra.mxu0 %v626
          %670 = vmatprep.subr.bf16.mxu0 %v630
          %671 = vmatpush1.bf16.msra.mxu0 %v629
          %672 = vmatprep.subr.bf16.mxu0 0
          %673 = vmatpush1.bf16.msra.mxu0 0
          %674 = vmatprep.subr.bf16.mxu0 0
          %675 = vmatpush1.bf16.msra.mxu0 0
          %676 = vmatprep.subr.bf16.mxu0 0
          %677 = vmatpush1.bf16.msra.mxu0 0
          %678 = vmatprep.subr.bf16.mxu0 0
          %679 = vmatpush1.bf16.msra.mxu0 0
          %680 = vmatprep.subr.bf16.mxu0 0
          %681 = vmatpush1.bf16.msra.mxu0 0
          %682 = vmatprep.subr.bf16.mxu0 0
          %683 = vmatpush1.bf16.msra.mxu0 0
          %684 = vmatprep.subr.bf16.mxu0 0
          %685 = vmatpush1.bf16.msra.mxu0 0
          %686 = vmatprep.subr.bf16.mxu0 0
          %687 = vmatpush1.bf16.msra.mxu0 0
          %688 = vmatprep.mubr.bf16.mxu0 0
          %689 = vmatmul.mubr.bf16.gmra.mrb[0].mxu0 %v378
          %v690 = vpop.f32.mrb[0].mxu0
          %v691 = vadd.f32 0.0, %v690
          %v692 = vpop.f32.mrb[0].mxu0
          %v693 = vadd.f32 0.0, %v692
          %v694 = vpop.f32.mrb[0].mxu0
          %v695 = vpop.f32.mrb[0].mxu0
          %696 = vdwg.mxu0
          %697 = vmatprep.subr.bf16.mxu0 0
          %698 = vmatpush1.bf16.msra.mxu0 %v610
          %699 = vmatprep.subr.bf16.mxu0 0
          %700 = vmatpush1.bf16.msra.mxu0 %v613
          %701 = vmatprep.subr.bf16.mxu0 0
          %702 = vmatpush1.bf16.msra.mxu0 %v616
          %703 = vmatprep.subr.bf16.mxu0 0
          %704 = vmatpush1.bf16.msra.mxu0 %v619
          %705 = vmatprep.subr.bf16.mxu0 0
          %706 = vmatpush1.bf16.msra.mxu0 %v622
          %707 = vmatprep.subr.bf16.mxu0 0
          %708 = vmatpush1.bf16.msra.mxu0 %v625
          %709 = vmatprep.subr.bf16.mxu0 0
          %710 = vmatpush1.bf16.msra.mxu0 %v628
          %711 = vmatprep.subr.bf16.mxu0 0
          %712 = vmatpush1.bf16.msra.mxu0 %v631
          %713 = vmatprep.subr.bf16.mxu0 0
          %714 = vmatpush1.bf16.msra.mxu0 0
          %715 = vmatprep.subr.bf16.mxu0 0
          %716 = vmatpush1.bf16.msra.mxu0 0
          %717 = vmatprep.subr.bf16.mxu0 0
          %718 = vmatpush1.bf16.msra.mxu0 0
          %719 = vmatprep.subr.bf16.mxu0 0
          %720 = vmatpush1.bf16.msra.mxu0 0
          %721 = vmatprep.subr.bf16.mxu0 0
          %722 = vmatpush1.bf16.msra.mxu0 0
          %723 = vmatprep.subr.bf16.mxu0 0
          %724 = vmatpush1.bf16.msra.mxu0 0
          %725 = vmatprep.subr.bf16.mxu0 0
          %726 = vmatpush1.bf16.msra.mxu0 0
          %727 = vmatprep.subr.bf16.mxu0 0
          %728 = vmatpush1.bf16.msra.mxu0 0
          %729 = vmatprep.mubr.bf16.mxu0 0
          %730 = vmatmul.mubr.bf16.gmra.mrb[0].mxu0 %v378
          %v731 = vpop.f32.mrb[0].mxu0
          %v732 = vadd.f32 0.0, %v731
          %v733 = vpop.f32.mrb[0].mxu0
          %v734 = vpop.f32.mrb[0].mxu0
          %v735 = vpop.f32.mrb[0].mxu0
          %736 = vdwg.mxu0
          %v737 = vpack.c.bf16 %v495, %v495
          %v738 = vld [vmem:[#allocation9] sm:$0xff]
          %v739 = vld [vmem:[#allocation9 + $0x8] sm:$0xf]
          %v740 = vld [vmem:[#allocation9 + $0xc] sm:$0xff]
          %v741 = vld [vmem:[#allocation9 + $0x14] sm:$0xf]
          %v742 = vld [vmem:[#allocation9 + $0x18] sm:$0xff]
          %v743 = vld [vmem:[#allocation9 + $0x20] sm:$0xf]
          %v744 = vld [vmem:[#allocation9 + $0x24] sm:$0xff]
          %v745 = vld [vmem:[#allocation9 + $0x2c] sm:$0xf]
          %v746 = vld [vmem:[#allocation9 + $0x30] sm:$0xff]
          %v747 = vld [vmem:[#allocation9 + $0x38] sm:$0xf]
          %v748 = vld [vmem:[#allocation9 + $0x3c] sm:$0xff]
          %v749 = vld [vmem:[#allocation9 + $0x44] sm:$0xf]
          %v750 = vld [vmem:[#allocation9 + $0x48] sm:$0xff]
          %v751 = vld [vmem:[#allocation9 + $0x50] sm:$0xf]
          %v752 = vld [vmem:[#allocation9 + $0x54] sm:$0xff]
          %v753 = vld [vmem:[#allocation9 + $0x5c] sm:$0xf]
          %v754 = vld [vmem:[#allocation9 + $0x60] sm:$0xff]
          %v755 = vld [vmem:[#allocation9 + $0x68] sm:$0xf]
          %v756 = vld [vmem:[#allocation9 + $0x6c] sm:$0xff]
          %v757 = vld [vmem:[#allocation9 + $0x74] sm:$0xf]
          %v758 = vld [vmem:[#allocation9 + $0x78] sm:$0xff]
          %v759 = vld [vmem:[#allocation9 + $0x80] sm:$0xf]
          %v760 = vld [vmem:[#allocation9 + $0x84] sm:$0xff]
          %v761 = vld [vmem:[#allocation9 + $0x8c] sm:$0xf]
          %v762 = vld [vmem:[#allocation9 + $0x90] sm:$0xff]
          %v763 = vld [vmem:[#allocation9 + $0x98] sm:$0xf]
          %v764 = vld [vmem:[#allocation9 + $0x9c] sm:$0xff]
          %v765 = vld [vmem:[#allocation9 + $0xa4] sm:$0xf]
          %v766 = vld [vmem:[#allocation9 + $0xa8] sm:$0xff]
          %v767 = vld [vmem:[#allocation9 + $0xb0] sm:$0xf]
          %v768 = vld [vmem:[#allocation9 + $0xb4] sm:$0xff]
          %v769 = vld [vmem:[#allocation9 + $0xbc] sm:$0xf]
          %v802 = vunpack.c.l.b16 %v738
          %v803 = vunpack.c.h.b16 %v738
          %v804 = vunpack.c.l.b16 %v739
          %v805 = vunpack.c.l.b16 %v740
          %v806 = vunpack.c.h.b16 %v740
          %v807 = vunpack.c.l.b16 %v741
          %v808 = vunpack.c.l.b16 %v742
          %v809 = vunpack.c.h.b16 %v742
          %v810 = vunpack.c.l.b16 %v743
          %v811 = vunpack.c.l.b16 %v744
          %v812 = vunpack.c.h.b16 %v744
          %v813 = vunpack.c.l.b16 %v745
          %v814 = vunpack.c.l.b16 %v746
          %v815 = vunpack.c.h.b16 %v746
          %v816 = vunpack.c.l.b16 %v747
          %v817 = vunpack.c.l.b16 %v748
          %v818 = vunpack.c.h.b16 %v748
          %v819 = vunpack.c.l.b16 %v749
          %v820 = vunpack.c.l.b16 %v750
          %v821 = vunpack.c.h.b16 %v750
          %v822 = vunpack.c.l.b16 %v751
          %v823 = vunpack.c.l.b16 %v752
          %v824 = vunpack.c.h.b16 %v752
          %v825 = vunpack.c.l.b16 %v753
          %v826 = vunpack.c.l.b16 %v754
          %v827 = vunpack.c.h.b16 %v754
          %v828 = vunpack.c.l.b16 %v755
          %v829 = vunpack.c.l.b16 %v756
          %v830 = vunpack.c.h.b16 %v756
          %v831 = vunpack.c.l.b16 %v757
          %v832 = vunpack.c.l.b16 %v758
          %v833 = vunpack.c.h.b16 %v758
          %v834 = vunpack.c.l.b16 %v759
          %v835 = vunpack.c.l.b16 %v760
          %v836 = vunpack.c.h.b16 %v760
          %v837 = vunpack.c.l.b16 %v761
          %v838 = vunpack.c.l.b16 %v762
          %v839 = vunpack.c.h.b16 %v762
          %v840 = vunpack.c.l.b16 %v763
          %v841 = vunpack.c.l.b16 %v764
          %v842 = vunpack.c.h.b16 %v764
          %v843 = vunpack.c.l.b16 %v765
          %v844 = vunpack.c.l.b16 %v766
          %v845 = vunpack.c.h.b16 %v766
          %v846 = vunpack.c.l.b16 %v767
          %v847 = vunpack.c.l.b16 %v768
          %v848 = vunpack.c.h.b16 %v768
          %v849 = vunpack.c.l.b16 %v769
          %v850 = vpack.c.b16 %v805, %v802
          %v851 = vpack.c.b16 %v806, %v803
          %v852 = vpack.c.b16 %v807, %v804
          %v853 = vpack.c.b16 %v811, %v808
          %v854 = vpack.c.b16 %v812, %v809
          %v855 = vpack.c.b16 %v813, %v810
          %v856 = vpack.c.b16 %v817, %v814
          %v857 = vpack.c.b16 %v818, %v815
          %v858 = vpack.c.b16 %v819, %v816
          %v859 = vpack.c.b16 %v823, %v820
          %v860 = vpack.c.b16 %v824, %v821
          %v861 = vpack.c.b16 %v825, %v822
          %v862 = vpack.c.b16 %v829, %v826
          %v863 = vpack.c.b16 %v830, %v827
          %v864 = vpack.c.b16 %v831, %v828
          %v865 = vpack.c.b16 %v835, %v832
          %v866 = vpack.c.b16 %v836, %v833
          %v867 = vpack.c.b16 %v837, %v834
          %v868 = vpack.c.b16 %v841, %v838
          %v869 = vpack.c.b16 %v842, %v839
          %v870 = vpack.c.b16 %v843, %v840
          %v871 = vpack.c.b16 %v847, %v844
          %v872 = vpack.c.b16 %v848, %v845
          %v873 = vpack.c.b16 %v849, %v846
          %898 = vmatprep.subr.bf16.mxu0 %v851
          %899 = vmatpush1.bf16.msra.mxu0 %v850
          %900 = vmatprep.subr.bf16.mxu0 %v854
          %901 = vmatpush1.bf16.msra.mxu0 %v853
          %902 = vmatprep.subr.bf16.mxu0 %v857
          %903 = vmatpush1.bf16.msra.mxu0 %v856
          %904 = vmatprep.subr.bf16.mxu0 %v860
          %905 = vmatpush1.bf16.msra.mxu0 %v859
          %906 = vmatprep.subr.bf16.mxu0 %v863
          %907 = vmatpush1.bf16.msra.mxu0 %v862
          %908 = vmatprep.subr.bf16.mxu0 %v866
          %909 = vmatpush1.bf16.msra.mxu0 %v865
          %910 = vmatprep.subr.bf16.mxu0 %v869
          %911 = vmatpush1.bf16.msra.mxu0 %v868
          %912 = vmatprep.subr.bf16.mxu0 %v872
          %913 = vmatpush1.bf16.msra.mxu0 %v871
          %914 = vmatprep.subr.bf16.mxu0 0
          %915 = vmatpush1.bf16.msra.mxu0 0
          %916 = vmatprep.subr.bf16.mxu0 0
          %917 = vmatpush1.bf16.msra.mxu0 0
          %918 = vmatprep.subr.bf16.mxu0 0
          %919 = vmatpush1.bf16.msra.mxu0 0
          %920 = vmatprep.subr.bf16.mxu0 0
          %921 = vmatpush1.bf16.msra.mxu0 0
          %922 = vmatprep.subr.bf16.mxu0 0
          %923 = vmatpush1.bf16.msra.mxu0 0
          %924 = vmatprep.subr.bf16.mxu0 0
          %925 = vmatpush1.bf16.msra.mxu0 0
          %926 = vmatprep.subr.bf16.mxu0 0
          %927 = vmatpush1.bf16.msra.mxu0 0
          %928 = vmatprep.subr.bf16.mxu0 0
          %929 = vmatpush1.bf16.msra.mxu0 0
          %930 = vmatprep.mubr.bf16.mxu0 0
          %931 = vmatmul.mubr.bf16.gmra.mrb[0].mxu0 %v737
          %v932 = vpop.f32.mrb[0].mxu0
          %v933 = vadd.f32 0.0, %v932
          %v934 = vpop.f32.mrb[0].mxu0
          %v935 = vadd.f32 0.0, %v934
          %v936 = vpop.f32.mrb[0].mxu0
          %v937 = vpop.f32.mrb[0].mxu0
          %938 = vdwg.mxu0
          %939 = vmatprep.subr.bf16.mxu0 0
          %940 = vmatpush1.bf16.msra.mxu0 %v852
          %941 = vmatprep.subr.bf16.mxu0 0
          %942 = vmatpush1.bf16.msra.mxu0 %v855
          %943 = vmatprep.subr.bf16.mxu0 0
          %944 = vmatpush1.bf16.msra.mxu0 %v858
          %945 = vmatprep.subr.bf16.mxu0 0
          %946 = vmatpush1.bf16.msra.mxu0 %v861
          %947 = vmatprep.subr.bf16.mxu0 0
          %948 = vmatpush1.bf16.msra.mxu0 %v864
          %949 = vmatprep.subr.bf16.mxu0 0
          %950 = vmatpush1.bf16.msra.mxu0 %v867
          %951 = vmatprep.subr.bf16.mxu0 0
          %952 = vmatpush1.bf16.msra.mxu0 %v870
          %953 = vmatprep.subr.bf16.mxu0 0
          %954 = vmatpush1.bf16.msra.mxu0 %v873
          %955 = vmatprep.subr.bf16.mxu0 0
          %956 = vmatpush1.bf16.msra.mxu0 0
          %957 = vmatprep.subr.bf16.mxu0 0
          %958 = vmatpush1.bf16.msra.mxu0 0
          %959 = vmatprep.subr.bf16.mxu0 0
          %960 = vmatpush1.bf16.msra.mxu0 0
          %961 = vmatprep.subr.bf16.mxu0 0
          %962 = vmatpush1.bf16.msra.mxu0 0
          %963 = vmatprep.subr.bf16.mxu0 0
          %964 = vmatpush1.bf16.msra.mxu0 0
          %965 = vmatprep.subr.bf16.mxu0 0
          %966 = vmatpush1.bf16.msra.mxu0 0
          %967 = vmatprep.subr.bf16.mxu0 0
          %968 = vmatpush1.bf16.msra.mxu0 0
          %969 = vmatprep.subr.bf16.mxu0 0
          %970 = vmatpush1.bf16.msra.mxu0 0
          %971 = vmatprep.mubr.bf16.mxu0 0
          %972 = vmatmul.mubr.bf16.gmra.mrb[0].mxu0 %v737
          %v973 = vpop.f32.mrb[0].mxu0
          %v974 = vadd.f32 0.0, %v973
          %v975 = vpop.f32.mrb[0].mxu0
          %v976 = vpop.f32.mrb[0].mxu0
          %v977 = vpop.f32.mrb[0].mxu0
          %978 = vdwg.mxu0
          %v979 = vmul.f32 %v691, %v933
          %v980 = vmul.f32 %v693, %v935
          %v981 = vadd.f32 %v979, %v980
          %v982 = vmul.f32 %v732, %v974
          %v983 = vadd.f32 %v981, %v982
          %v984 = vld [vmem:[%s5] sm:$0x1]
          %v986 = vlaneseq
          %v987 = vshrl.u32 %v986, 7
          %v988 = vsub.s32 0, %v987
          %v989 = vrot.slane %v984, %v988
          %v991 = vadd.f32 %v983, %v989
          %992 = vmax.xlane.f32.xlu0 %v991
          %v993 = vpop.xlane.xlu0 %992
          %v994 = vsub.f32 %v991, %v993
          %v995 = vmul.f32 %v994, 1.442695
          %v996 = vpow.pop %v995
          %997 = vadd.xlane.f32.xlu0 %v996
          %v998 = vpop.xlane.xlu0 %997
          %v999 = vrcp.pop %v998
          %v1000 = vmul.f32 %v996, %v999
          %v1001 = vpack.c.bf16 %v1000, %v1000
          %1002 = vst [vmem:[#allocation2] sm:$0xf] %v1001
        $region72: #{tpu_custom_call.1} parent=47 // pred_fallthru
          _
        %v1003 = vld [vmem:[#allocation2] sm:$0xf]
        %v1004 = vld [vmem:[#allocation11] sm:$0xf]
        %v1005 = vld [vmem:[#allocation11 + $0x4] sm:$0xf]
        %v1006 = vld [vmem:[#allocation11 + $0x8] sm:$0xf]
        %v1007 = vld [vmem:[#allocation11 + $0xc] sm:$0xf]
        %v1008 = vld [vmem:[#allocation11 + $0x10] sm:$0xf]
        %v1009 = vld [vmem:[#allocation11 + $0x14] sm:$0xf]
        %v1010 = vld [vmem:[#allocation11 + $0x18] sm:$0xf]
        %v1011 = vld [vmem:[#allocation11 + $0x1c] sm:$0xf]
        %v1012 = vld [vmem:[#allocation11 + $0x20] sm:$0xf]
        %v1013 = vld [vmem:[#allocation11 + $0x24] sm:$0xf]
        %v1014 = vld [vmem:[#allocation11 + $0x28] sm:$0xf]
        %v1015 = vld [vmem:[#allocation11 + $0x2c] sm:$0xf]
        %v1016 = vld [vmem:[#allocation11 + $0x30] sm:$0xf]
        %v1017 = vld [vmem:[#allocation11 + $0x34] sm:$0xf]
        %v1018 = vld [vmem:[#allocation11 + $0x38] sm:$0xf]
        %v1019 = vld [vmem:[#allocation11 + $0x3c] sm:$0xf]
        %v1036 = vunpack.c.l.b16 %v1004
        %v1037 = vunpack.c.l.b16 %v1005
        %v1038 = vunpack.c.l.b16 %v1006
        %v1039 = vunpack.c.l.b16 %v1007
        %v1040 = vunpack.c.l.b16 %v1008
        %v1041 = vunpack.c.l.b16 %v1009
        %v1042 = vunpack.c.l.b16 %v1010
        %v1043 = vunpack.c.l.b16 %v1011
        %v1044 = vunpack.c.l.b16 %v1012
        %v1045 = vunpack.c.l.b16 %v1013
        %v1046 = vunpack.c.l.b16 %v1014
        %v1047 = vunpack.c.l.b16 %v1015
        %v1048 = vunpack.c.l.b16 %v1016
        %v1049 = vunpack.c.l.b16 %v1017
        %v1050 = vunpack.c.l.b16 %v1018
        %v1051 = vunpack.c.l.b16 %v1019
        %v1052 = vpack.c.b16 %v1037, %v1036
        %v1053 = vpack.c.b16 %v1039, %v1038
        %v1054 = vpack.c.b16 %v1041, %v1040
        %v1055 = vpack.c.b16 %v1043, %v1042
        %v1056 = vpack.c.b16 %v1045, %v1044
        %v1057 = vpack.c.b16 %v1047, %v1046
        %v1058 = vpack.c.b16 %v1049, %v1048
        %v1059 = vpack.c.b16 %v1051, %v1050
        %1068 = vmatprep.subr.bf16.mxu0 0
        %1069 = vmatpush1.bf16.msra.mxu0 %v1052
        %1070 = vmatprep.subr.bf16.mxu0 0
        %1071 = vmatpush1.bf16.msra.mxu0 %v1053
        %1072 = vmatprep.subr.bf16.mxu0 0
        %1073 = vmatpush1.bf16.msra.mxu0 %v1054
        %1074 = vmatprep.subr.bf16.mxu0 0
        %1075 = vmatpush1.bf16.msra.mxu0 %v1055
        %1076 = vmatprep.subr.bf16.mxu0 0
        %1077 = vmatpush1.bf16.msra.mxu0 %v1056
        %1078 = vmatprep.subr.bf16.mxu0 0
        %1079 = vmatpush1.bf16.msra.mxu0 %v1057
        %1080 = vmatprep.subr.bf16.mxu0 0
        %1081 = vmatpush1.bf16.msra.mxu0 %v1058
        %1082 = vmatprep.subr.bf16.mxu0 0
        %1083 = vmatpush1.bf16.msra.mxu0 %v1059
        %1084 = vmatprep.subr.bf16.mxu0 0
        %1085 = vmatpush1.bf16.msra.mxu0 0
        %1086 = vmatprep.subr.bf16.mxu0 0
        %1087 = vmatpush1.bf16.msra.mxu0 0
        %1088 = vmatprep.subr.bf16.mxu0 0
        %1089 = vmatpush1.bf16.msra.mxu0 0
        %1090 = vmatprep.subr.bf16.mxu0 0
        %1091 = vmatpush1.bf16.msra.mxu0 0
        %1092 = vmatprep.subr.bf16.mxu0 0
        %1093 = vmatpush1.bf16.msra.mxu0 0
        %1094 = vmatprep.subr.bf16.mxu0 0
        %1095 = vmatpush1.bf16.msra.mxu0 0
        %1096 = vmatprep.subr.bf16.mxu0 0
        %1097 = vmatpush1.bf16.msra.mxu0 0
        %1098 = vmatprep.subr.bf16.mxu0 0
        %1099 = vmatpush1.bf16.msra.mxu0 0
        %1100 = vmatprep.mubr.bf16.mxu0 0
        %1101 = vmatmul.mubr.bf16.gmra.mrb[0].mxu0 %v1003
        %v1102 = vpop.f32.mrb[0].mxu0
        %v1103 = vadd.f32 0.0, %v1102
        %v1104 = vpop.f32.mrb[0].mxu0
        %v1105 = vpop.f32.mrb[0].mxu0
        %v1106 = vpop.f32.mrb[0].mxu0
        %1107 = vdwg.mxu0
        %v1108 = vmax.f32 %v1103, 1e-08
        %v1109 = vlog2.pop %v1108
        %v1110 = vmul.f32 %v1109, 0.6931472
        %1111 = vst [vmem:[%s372] sm:$0xff] %v1110
        %s1112 = sand.u32 %s205, 1
        %s1113 = scalar_lea.sflag [#allocation5], %s1112
        %s1114 = sand.u32 %s205, 1
        %s1115 = smul.addr %s1114, 8
        %s1116 = scalar_lea.vmem [#allocation12], %s1115
        // Predicated region
        $region73: #{tpu_custom_call.1} parent=47 // pred_check
          %p1117 = pneg %p215
        $region74: #{tpu_custom_call.1} parent=47 // pred_check_branch
          %1119 = sbr.rel (%p1117) target = $region76
        $region75: #{tpu_custom_call.1} parent=47 // pred_region
          %s1121 = ssub.s32 128, 128
          %1122 = vsyncadd %s1113, %s1121
          %s1123 = sadd.s32 %s31, %s30
          %s1124 = smul.addr %s1123, 128
          %s1125 = scalar_lea.hbm %s7, %s1124
          %s1127 = sshll.u32 %s1116, 4
          %s1128 = int_to_ptr.vmem [resolvable:$true] %s1127
          %1130 = dma.vmem_to_hbm [thread:$0]  %s1128, 128, %s1125, %s1113
        $region76: #{tpu_custom_call.1} parent=47 // pred_fallthru
          _
      $region48: #{tpu_custom_call.1} parent=5 // pred_fallthru
        _
      %p1131 = scmp.le.s32.totalorder 2, %s21
      // Predicated region
      $region77: #{tpu_custom_call.1} parent=5 // pred_check
        %p1132 = pneg %p1131
      $region78: #{tpu_custom_call.1} parent=5 // pred_check_branch
        %1134 = sbr.rel (%p1132) target = $region80
      $region79: #{tpu_custom_call.1} parent=5 // pred_region
        %s1135 = ssub.s32 %s21, 2
        // Predicated region
        $region81: #{tpu_custom_call.1} parent=79 // pred_check
          %p1136 = pneg %p221
        $region82: #{tpu_custom_call.1} parent=79 // pred_check_branch
          %1138 = sbr.rel (%p1136) target = $region84
        $region83: #{tpu_custom_call.1} parent=79 // pred_region
          %s1139 = sand.u32 %s206, 1
          %s1140 = scalar_lea.sflag [#allocation5], %s1139
          %s1141 = sand.u32 %s206, 1
          %s1142 = smul.addr %s1141, 8
          %s1143 = scalar_lea.vmem [#allocation12], %s1142
          %1144 = dma.done %s1140, 128
        $region84: #{tpu_custom_call.1} parent=79 // pred_fallthru
          _
      $region80: #{tpu_custom_call.1} parent=5 // pred_fallthru
        _
    $region6: #{tpu_custom_call.1} parent=1 // loop_footer
      %s25 = sadd.s32 1, %s21
    $region7: #{tpu_custom_call.1} parent=1 // loop_footer_branch
      %20 = sbr.rel target = $region3
    $region8: #{tpu_custom_call.1} parent=1 // loop_exit
      _
    %1145 = vsyncpa [#allocation4], 1
    %s1146 = scalar_lea.sflag [#allocation4], 1
    %1147 = vsyncpa %s1146, 1
    %1148 = vsyncpa [#allocation7], 1
    %1149 = vsyncpa [#allocation10], 1
    %1150 = vsyncpa [#allocation5], 1
    %s1151 = scalar_lea.sflag [#allocation5], 1
    %1152 = vsyncpa %s1151, 1

</llo_original>
